<compile_context>
chip_gen: v7x
topology: tpu7x:2x2x1
jax: 0.10.0
libtpu: 0.0.40
codegen_flags: <defaults>
</compile_context>

<pallas_src>
import functools
import math

import jax
import jax.numpy as jnp
import numpy as np
from jax import lax
from jax.experimental import pallas as pl
from jax.experimental.pallas import tpu as pltpu


# ----------------------------------------------------------------------------
# Small helpers
# ----------------------------------------------------------------------------
def _layernorm(x, scale, shift, eps=1e-5):
    # matches nn.LayerNorm (biased variance)
    mean = jnp.mean(x, axis=-1, keepdims=True)
    var = jnp.mean((x - mean) ** 2, axis=-1, keepdims=True)
    return (x - mean) * lax.rsqrt(var + eps) * scale + shift


def _gelu(x):
    # tanh-approximate GELU
    return jax.nn.gelu(x, approximate=True)


def _round_up(x, m):
    return ((x + m - 1) // m) * m


def _vocab_tiling(V, target=2048):
    """Returns (tile, padded_vocab): tile is 128-aligned and <= target."""
    if V <= target:
        tv = _round_up(V, 128)
        return tv, tv
    return target, _round_up(V, target)


def _vmem_limit_bytes():
    """Generation-aware scoped-VMEM limit: 75% of physical, capped at 100 MiB."""
    cap = 64 * 1024 * 1024  # conservative fallback (v7x physical)
    try:
        fn = getattr(pltpu, "get_tpu_info", None)
        if fn is not None:
            cap = int(fn().vmem_capacity_bytes)
    except Exception:
        pass
    return int(min(max(cap * 0.75, 32 * 1024 * 1024), 100 * 1024 * 1024))


# ----------------------------------------------------------------------------
# Transformer block kernel: one batch element per grid step.
# ----------------------------------------------------------------------------
def _block_kernel(x_ref,
                  ln1_s_ref, ln1_b_ref,
                  wqkv_t_ref, bqkv_t_ref,
                  wo_ref, bo_ref,
                  ln2_s_ref, ln2_b_ref,
                  w1_ref, b1_ref, w2_ref, b2_ref,
                  fn_s_ref, fn_b_ref,
                  out_ref,
                  *, n_heads, apply_final_ln):
    bf16 = jnp.bfloat16
    f32 = jnp.float32

    x = x_ref[0].astype(f32)                       # (S, D) residual stream (f32 in-kernel)
    S, D = x.shape
    dh = D // n_heads
    inv_sqrt_dh = 1.0 / math.sqrt(dh)

    # ---------------- attention ----------------
    h = _layernorm(x, ln1_s_ref[...], ln1_b_ref[...]).astype(bf16)       # (S, D)

    # Fused QKV, computed transposed:  qkv^T = Wqkv^T . h^T   ->  (3D, S)
    # ('ed,sd->es' contracts the shared D axis of both operands: MXU "NT" form.)
    qkv_t = jnp.einsum('ed,sd->es', wqkv_t_ref[...], h,
                       preferred_element_type=f32) + bqkv_t_ref[...]     # (3D, S) f32

    q_t = qkv_t[:D] * inv_sqrt_dh                  # (D, S)
    k_t = qkv_t[D:2 * D]
    v_t = qkv_t[2 * D:]

    # Head-major views: sublane-aligned reshapes (dh is a multiple of 8).
    q_hds = q_t.reshape(n_heads, dh, S)            # (H, dh, S) f32
    k_hds = k_t.reshape(n_heads, dh, S).astype(bf16)
    v_hds = v_t.reshape(n_heads, dh, S).astype(bf16)
    q_hsd = jnp.transpose(q_hds, (0, 2, 1)).astype(bf16)                 # (H, S, dh)

    # Query-chunked causal attention: live scores are (H, TQ, kv_len), and
    # fully-masked KV positions beyond the chunk's last row are skipped.
    TQ = min(S, 256)
    nq = -(-S // TQ)
    ctx_t_parts = []
    for qi in range(nq):
        qs = qi * TQ
        tq = min(TQ, S - qs)
        kv_len = qs + tq                            # causal truncation
        qc = q_hsd[:, qs:qs + tq, :]                # (H, tq, dh)  bf16
        kc = k_hds[:, :, :kv_len]                   # (H, dh, kv)  bf16
        vc = v_hds[:, :, :kv_len]                   # (H, dh, kv)  bf16

        s = jnp.einsum('hqd,hdk->hqk', qc, kc,
                       preferred_element_type=f32)  # (H, tq, kv)
        row = lax.broadcasted_iota(jnp.int32, (tq, kv_len), 0) + qs
        col = lax.broadcasted_iota(jnp.int32, (tq, kv_len), 1)
        s = jnp.where((col > row)[None], -1e30, s)  # 2-D mask, broadcast over H

        m = jnp.max(s, axis=-1, keepdims=True)
        e = jnp.exp(s - m)
        denom = jnp.sum(e, axis=-1, keepdims=True)
        p = (e * pl.reciprocal(denom, approx=True)).astype(bf16)         # softmax

        # ctx^T chunk: (H, dh, tq)  ("NT" batched matmul, contract over kv)
        ctx_t_parts.append(jnp.einsum('hdk,hqk->hdq', vc, p,
                                      preferred_element_type=f32))
    ctx_t = ctx_t_parts[0] if nq == 1 else jnp.concatenate(ctx_t_parts, axis=2)

    # (H, dh, S) -> (D, S) -> (S, D): heads land lane-contiguous on the feature axis.
    ctx = jnp.transpose(ctx_t.reshape(D, S), (1, 0)).astype(bf16)        # (S, D)

    # Single output projection + residual 1.
    x = x + jnp.dot(ctx, wo_ref[...], preferred_element_type=f32) + bo_ref[...]

    # ---------------- feed-forward ----------------
    h2 = _layernorm(x, ln2_s_ref[...], ln2_b_ref[...]).astype(bf16)
    f = jnp.dot(h2, w1_ref[...], preferred_element_type=f32) + b1_ref[...]
    f = _gelu(f).astype(bf16)
    x = x + jnp.dot(f, w2_ref[...], preferred_element_type=f32) + b2_ref[...]

    # Fold the model's final LayerNorm into the last block so the vocab
    # projection kernel reads pre-normalized bf16 activations.
    if apply_final_ln:
        x = _layernorm(x, fn_s_ref[...], fn_b_ref[...])
    out_ref[0] = x.astype(out_ref.dtype)


def transformer_block(x, p, fn_s, fn_b, n_heads, apply_final_ln):
    """x: (B, S, D) bfloat16 residual stream.  Returns (B, S, D) bfloat16."""
    B, S, D = x.shape
    H = p["w1"].shape[1]

    def rep(shape):
        zeros = (0,) * len(shape)
        return pl.BlockSpec(shape, lambda b, z=zeros: z)

    in_specs = [
        pl.BlockSpec((1, S, D), lambda b: (b, 0, 0)),  # x
        rep((1, D)), rep((1, D)),                      # ln1 scale/shift
        rep((3 * D, D)), rep((3 * D, 1)),              # wqkv^T, bqkv^T
        rep((D, D)), rep((1, D)),                      # wo, bo
        rep((1, D)), rep((1, D)),                      # ln2 scale/shift
        rep((D, H)), rep((1, H)),                      # w1, b1
        rep((H, D)), rep((1, D)),                      # w2, b2
        rep((1, D)), rep((1, D)),                      # final-norm scale/shift
    ]
    out_spec = pl.BlockSpec((1, S, D), lambda b: (b, 0, 0))

    kernel = functools.partial(_block_kernel, n_heads=n_heads,
                               apply_final_ln=apply_final_ln)
    return pl.pallas_call(
        kernel,
        out_shape=jax.ShapeDtypeStruct((B, S, D), jnp.bfloat16),
        grid_spec=pltpu.PrefetchScalarGridSpec(
            num_scalar_prefetch=0, grid=(B,),
            in_specs=in_specs, out_specs=out_spec),
        compiler_params=pltpu.CompilerParams(
            dimension_semantics=("parallel",),
            vmem_limit_bytes=_vmem_limit_bytes()),
    )(x,
      p["ln1_s"], p["ln1_b"],
      p["wqkv_t"], p["bqkv_t"],
      p["wo"], p["bo"],
      p["ln2_s"], p["ln2_b"],
      p["w1"], p["b1"], p["w2"], p["b2"],
      fn_s, fn_b)


# ----------------------------------------------------------------------------
# Vocab projection kernel: input is already final-layernormed bf16.
# Tiled over the (padded) vocab dimension.
# ----------------------------------------------------------------------------
def _head_kernel(x_ref, w_ref, bias_ref, out_ref):
    y = jnp.dot(x_ref[0], w_ref[...], preferred_element_type=jnp.float32)
    out_ref[0] = (y + bias_ref[...]).astype(out_ref.dtype)


def final_proj(xn, w_proj, b_proj, vocab_size, vocab_tile,
               out_dtype=jnp.bfloat16):
    """xn: (B, S, D) bf16 pre-normalized activations; w_proj padded (D, V_pad)."""
    B, S, D = xn.shape
    V_pad = w_proj.shape[1]
    TV = vocab_tile
    nv = V_pad // TV
    logits = pl.pallas_call(
        _head_kernel,
        out_shape=jax.ShapeDtypeStruct((B, S, V_pad), out_dtype),
        grid_spec=pltpu.PrefetchScalarGridSpec(
            num_scalar_prefetch=0, grid=(B, nv),
            in_specs=[
                pl.BlockSpec((1, S, D), lambda b, j: (b, 0, 0)),
                pl.BlockSpec((D, TV), lambda b, j: (0, j)),
                pl.BlockSpec((1, TV), lambda b, j: (0, j)),
            ],
            out_specs=pl.BlockSpec((1, S, TV), lambda b, j: (b, 0, j))),
        compiler_params=pltpu.CompilerParams(
            dimension_semantics=("parallel", "parallel"),
            vmem_limit_bytes=_vmem_limit_bytes()),
    )(xn, w_proj, b_proj)
    if V_pad != vocab_size:
        logits = logits[:, :, :vocab_size]
    return logits


# ----------------------------------------------------------------------------
# Full model
# ----------------------------------------------------------------------------
def gpt_forward(token_ids, kparams, cfg):
    """token_ids: (B, S) int32 -> logits (B, S, vocab_size) bfloat16."""
    B, S = token_ids.shape
    # Embedding gather + positional add done in plain JAX (glue).
    tok = jnp.take(kparams["tok_emb"], token_ids, axis=0)         # (B, S, D) f32
    pos = kparams["pos_emb"][:S]                                  # (S, D) f32
    x = (tok + pos[None, :, :]).astype(jnp.bfloat16)              # bf16 residual stream
    # dropout(drop_rate) in eval mode -> identity
    blocks = kparams["blocks"]
    if blocks:
        for i, p in enumerate(blocks):
            x = transformer_block(x, p, kparams["fn_s"], kparams["fn_b"],
                                  cfg["n_heads"],
                                  apply_final_ln=(i == len(blocks) - 1))
    else:  # degenerate 0-layer model: still apply the final norm
        x = _layernorm(x.astype(jnp.float32),
                       kparams["fn_s"], kparams["fn_b"]).astype(jnp.bfloat16)
    return final_proj(x, kparams["w_proj"], kparams["b_proj"],
                      kparams["vocab_size"], kparams["vocab_tile"])


# ----------------------------------------------------------------------------
# Parameter preparation: f32 masters -> fused / bf16 / padded kernel params
# ----------------------------------------------------------------------------
def prepare_params(params, cfg):
    bf = jnp.bfloat16
    V = cfg["vocab_size"]
    TV, V_pad = _vocab_tiling(V)

    w_proj = params["w_proj"].astype(bf)
    b_proj = params["b_proj"]
    if V_pad != V:
        w_proj = jnp.pad(w_proj, ((0, 0), (0, V_pad - V)))
        b_proj = jnp.pad(b_proj, ((0, 0), (0, V_pad - V)))

    blocks = []
    for p in params["blocks"]:
        wqkv = jnp.concatenate([p["wq"], p["wk"], p["wv"]], axis=1)   # (D, 3D)
        bqkv = jnp.concatenate([p["bq"], p["bk"], p["bv"]], axis=1)   # (1, 3D)
        blocks.append({
            "ln1_s": p["ln1_s"], "ln1_b": p["ln1_b"],
            "wqkv_t": jnp.transpose(wqkv).astype(bf),                 # (3D, D) bf16
            "bqkv_t": jnp.transpose(bqkv),                            # (3D, 1) f32
            "wo": p["wo"].astype(bf), "bo": p["bo"],
            "ln2_s": p["ln2_s"], "ln2_b": p["ln2_b"],
            "w1": p["w1"].astype(bf), "b1": p["b1"],
            "w2": p["w2"].astype(bf), "b2": p["b2"],
        })
    return {
        "tok_emb": params["tok_emb"], "pos_emb": params["pos_emb"],
        "fn_s": params["fn_s"], "fn_b": params["fn_b"],
        "w_proj": w_proj, "b_proj": b_proj,
        "vocab_size": V, "vocab_tile": TV,
        "blocks": blocks,
    }


# ----------------------------------------------------------------------------
# Pure-JAX reference (same math, original layout, bf16 matmul operands)
# ----------------------------------------------------------------------------
def gpt_forward_ref(token_ids, params, cfg):
    B, S = token_ids.shape
    D = cfg["dim"]
    nh = cfg["n_heads"]
    dh = D // nh
    bf = jnp.bfloat16

    def mm(a, w):
        return jnp.dot(a.astype(bf), w.astype(bf),
                       preferred_element_type=jnp.float32)

    x = jnp.take(params["tok_emb"], token_ids, axis=0) + params["pos_emb"][:S][None]
    row = np.arange(S)[:, None]
    col = np.arange(S)[None, :]
    mask = jnp.asarray(col > row)
    for p in params["blocks"]:
        h = _layernorm(x, p["ln1_s"], p["ln1_b"])
        q = mm(h, p["wq"]) + p["bq"]
        k = mm(h, p["wk"]) + p["bk"]
        v = mm(h, p["wv"]) + p["bv"]
        q = q.reshape(B, S, nh, dh).transpose(0, 2, 1, 3)
        k = k.reshape(B, S, nh, dh).transpose(0, 2, 1, 3)
        v = v.reshape(B, S, nh, dh).transpose(0, 2, 1, 3)
        scores = jnp.einsum("bhqd,bhkd->bhqk", q.astype(bf), k.astype(bf),
                            preferred_element_type=jnp.float32) / math.sqrt(dh)
        scores = jnp.where(mask, -1e30, scores)
        attn = jax.nn.softmax(scores, axis=-1)
        ctx = jnp.einsum("bhqk,bhkd->bhqd", attn.astype(bf), v.astype(bf),
                         preferred_element_type=jnp.float32)
        ctx = ctx.transpose(0, 2, 1, 3).reshape(B, S, D)
        x = x + (mm(ctx, p["wo"]) + p["bo"])
        h2 = _layernorm(x, p["ln2_s"], p["ln2_b"])
        f = _gelu(mm(h2, p["w1"]) + p["b1"])
        x = x + (mm(f, p["w2"]) + p["b2"])
    hf = _layernorm(x, params["fn_s"], params["fn_b"])
    return mm(hf, params["w_proj"]) + params["b_proj"]


# ----------------------------------------------------------------------------
# Deterministic parameter init (f32 masters)
# ----------------------------------------------------------------------------
def init_params(key, cfg):
    D = cfg["dim"]
    V = cfg["vocab_size"]
    C = cfg["context_length"]
    H = 4 * D
    keys = iter(jax.random.split(key, 8 + 16 * cfg["n_layers"]))

    def w(shape, scale=0.02):
        return jax.random.normal(next(keys), shape, jnp.float32) * scale

    params = {
        "tok_emb": w((V, D)),
        "pos_emb": w((C, D)),
        "fn_s": jnp.ones((1, D), jnp.float32),
        "fn_b": jnp.zeros((1, D), jnp.float32),
        "w_proj": w((D, V)),
        "b_proj": jnp.zeros((1, V), jnp.float32),
        "blocks": [],
    }
    for _ in range(cfg["n_layers"]):
        params["blocks"].append({
            "ln1_s": jnp.ones((1, D), jnp.float32),
            "ln1_b": jnp.zeros((1, D), jnp.float32),
            "wq": w((D, D)), "bq": w((1, D)),
            "wk": w((D, D)), "bk": w((1, D)),
            "wv": w((D, D)), "bv": w((1, D)),
            "wo": w((D, D)), "bo": w((1, D)),
            "ln2_s": jnp.ones((1, D), jnp.float32),
            "ln2_b": jnp.zeros((1, D), jnp.float32),
            "w1": w((D, H)), "b1": w((1, H)),
            "w2": w((H, D)), "b2": w((1, D)),
        })
    return params


if __name__ == "__main__":
    cfg = {
        "vocab_size": 128,
        "context_length": 8,
        "dim": 32,
        "n_layers": 2,
        "n_heads": 4,
        "drop_rate": 0.0,   # eval mode -> dropout is identity
        "qkv_bias": True,
    }
    key = jax.random.PRNGKey(0)
    kp, kx = jax.random.split(key)
    params = init_params(kp, cfg)
    kparams = prepare_params(params, cfg)

    B, S = 2, 8
    token_ids = jax.random.randint(kx, (B, S), 0, cfg["vocab_size"], dtype=jnp.int32)

    logits = gpt_forward(token_ids, kparams, cfg)
    logits = jax.block_until_ready(logits)

    ref = jax.block_until_ready(gpt_forward_ref(token_ids, params, cfg))
    np.testing.assert_allclose(np.asarray(logits.astype(jnp.float32)),
                               np.asarray(ref), rtol=3e-2, atol=3e-2)
    assert logits.shape == (B, S, cfg["vocab_size"])
    print("KERNEL_OK")
</pallas_src>

<mosaic_0001>
module attributes {stable_mosaic.version = 11 : i64} {
  func.func @_block_kernel(%arg0: i32, %arg1: memref<1x8x32xbf16, #tpu.memory_space<vmem>>, %arg2: memref<1x32xf32, #tpu.memory_space<vmem>>, %arg3: memref<1x32xf32, #tpu.memory_space<vmem>>, %arg4: memref<96x32xbf16, #tpu.memory_space<vmem>>, %arg5: memref<96x1xf32, #tpu.memory_space<vmem>>, %arg6: memref<32x32xbf16, #tpu.memory_space<vmem>>, %arg7: memref<1x32xf32, #tpu.memory_space<vmem>>, %arg8: memref<1x32xf32, #tpu.memory_space<vmem>>, %arg9: memref<1x32xf32, #tpu.memory_space<vmem>>, %arg10: memref<32x128xbf16, #tpu.memory_space<vmem>>, %arg11: memref<1x128xf32, #tpu.memory_space<vmem>>, %arg12: memref<128x32xbf16, #tpu.memory_space<vmem>>, %arg13: memref<1x32xf32, #tpu.memory_space<vmem>>, %arg14: memref<1x32xf32, #tpu.memory_space<vmem>>, %arg15: memref<1x32xf32, #tpu.memory_space<vmem>>, %arg16: memref<1x8x32xbf16, #tpu.memory_space<vmem>>) attributes {dimension_semantics = [#tpu.dimension_semantics<parallel>], iteration_bounds = array<i64: 2>, scalar_prefetch = 0 : i64, scratch_operands = 0 : i64, tpu.core_type = #tpu.core_type<tc>, window_params = [{transform_indices = @transform_0, window_bounds = array<i64: 1, 8, 32>}, {pipeline_mode = #tpu.pipeline_mode<synchronous>, transform_indices = @transform_1, window_bounds = array<i64: 1, 32>}, {pipeline_mode = #tpu.pipeline_mode<synchronous>, transform_indices = @transform_2, window_bounds = array<i64: 1, 32>}, {pipeline_mode = #tpu.pipeline_mode<synchronous>, transform_indices = @transform_3, window_bounds = array<i64: 96, 32>}, {pipeline_mode = #tpu.pipeline_mode<synchronous>, transform_indices = @transform_4, window_bounds = array<i64: 96, 1>}, {pipeline_mode = #tpu.pipeline_mode<synchronous>, transform_indices = @transform_5, window_bounds = array<i64: 32, 32>}, {pipeline_mode = #tpu.pipeline_mode<synchronous>, transform_indices = @transform_6, window_bounds = array<i64: 1, 32>}, {pipeline_mode = #tpu.pipeline_mode<synchronous>, transform_indices = @transform_7, window_bounds = array<i64: 1, 32>}, {pipeline_mode = #tpu.pipeline_mode<synchronous>, transform_indices = @transform_8, window_bounds = array<i64: 1, 32>}, {pipeline_mode = #tpu.pipeline_mode<synchronous>, transform_indices = @transform_9, window_bounds = array<i64: 32, 128>}, {pipeline_mode = #tpu.pipeline_mode<synchronous>, transform_indices = @transform_10, window_bounds = array<i64: 1, 128>}, {pipeline_mode = #tpu.pipeline_mode<synchronous>, transform_indices = @transform_11, window_bounds = array<i64: 128, 32>}, {pipeline_mode = #tpu.pipeline_mode<synchronous>, transform_indices = @transform_12, window_bounds = array<i64: 1, 32>}, {pipeline_mode = #tpu.pipeline_mode<synchronous>, transform_indices = @transform_13, window_bounds = array<i64: 1, 32>}, {pipeline_mode = #tpu.pipeline_mode<synchronous>, transform_indices = @transform_14, window_bounds = array<i64: 1, 32>}, {transform_indices = @transform_15, window_bounds = array<i64: 1, 8, 32>}]} {
    %c0 = arith.constant 0 : index
    %c0_0 = arith.constant 0 : index
    %c0_1 = arith.constant 0 : index
    %0 = vector.load %arg1[%c0, %c0_0, %c0_1] : memref<1x8x32xbf16, #tpu.memory_space<vmem>>, vector<1x8x32xbf16>
    %1 = vector.shape_cast %0 : vector<1x8x32xbf16> to vector<8x32xbf16>
    %2 = arith.extf %1 : vector<8x32xbf16> to vector<8x32xf32>
    %c0_2 = arith.constant 0 : index
    %c0_3 = arith.constant 0 : index
    %3 = vector.load %arg2[%c0_2, %c0_3] : memref<1x32xf32, #tpu.memory_space<vmem>>, vector<1x32xf32>
    %c0_4 = arith.constant 0 : index
    %c0_5 = arith.constant 0 : index
    %4 = vector.load %arg3[%c0_4, %c0_5] : memref<1x32xf32, #tpu.memory_space<vmem>>, vector<1x32xf32>
    %cst = arith.constant dense<0.000000e+00> : vector<8xf32>
    %5 = vector.multi_reduction <add>, %2, %cst [1] : vector<8x32xf32> to vector<8xf32>
    %6 = vector.shape_cast %5 : vector<8xf32> to vector<8x1xf32>
    %cst_6 = arith.constant 3.200000e+01 : f32
    %7 = vector.broadcast %cst_6 : f32 to vector<8x1xf32>
    %8 = arith.divf %6, %7 : vector<8x1xf32>
    %9 = vector.broadcast %8 : vector<8x1xf32> to vector<8x32xf32>
    %10 = arith.subf %2, %9 : vector<8x32xf32>
    %11 = arith.mulf %10, %10 : vector<8x32xf32>
    %cst_7 = arith.constant dense<0.000000e+00> : vector<8xf32>
    %12 = vector.multi_reduction <add>, %11, %cst_7 [1] : vector<8x32xf32> to vector<8xf32>
    %13 = vector.shape_cast %12 : vector<8xf32> to vector<8x1xf32>
    %cst_8 = arith.constant 3.200000e+01 : f32
    %14 = vector.broadcast %cst_8 : f32 to vector<8x1xf32>
    %15 = arith.divf %13, %14 : vector<8x1xf32>
    %16 = vector.broadcast %8 : vector<8x1xf32> to vector<8x32xf32>
    %17 = arith.subf %2, %16 : vector<8x32xf32>
    %cst_9 = arith.constant 9.99999974E-6 : f32
    %18 = vector.broadcast %cst_9 : f32 to vector<8x1xf32>
    %19 = arith.addf %15, %18 : vector<8x1xf32>
    %20 = math.rsqrt %19 : vector<8x1xf32>
    %21 = vector.broadcast %20 : vector<8x1xf32> to vector<8x32xf32>
    %22 = arith.mulf %17, %21 : vector<8x32xf32>
    %23 = vector.broadcast %3 : vector<1x32xf32> to vector<8x32xf32>
    %24 = arith.mulf %22, %23 : vector<8x32xf32>
    %25 = vector.broadcast %4 : vector<1x32xf32> to vector<8x32xf32>
    %26 = arith.addf %24, %25 : vector<8x32xf32>
    %27 = arith.truncf %26 : vector<8x32xf32> to vector<8x32xbf16>
    %c0_10 = arith.constant 0 : index
    %c0_11 = arith.constant 0 : index
    %28 = vector.load %arg4[%c0_10, %c0_11] : memref<96x32xbf16, #tpu.memory_space<vmem>>, vector<96x32xbf16>
    "tpu.trace_start"() <{level = 10 : i32, message = "ed,sd->es"}> : () -> ()
    %cst_12 = arith.constant dense<0.000000e+00> : vector<96x8xf32>
    %29 = tpu.matmul %28, %27, %cst_12 {dimension_numbers = #tpu.dot_dimension_numbers<[1], [1], [0], [0], [0, 0, 1, 0], [], []>} : vector<96x32xbf16>, vector<8x32xbf16>, vector<96x8xf32> -> vector<96x8xf32>
    "tpu.trace_stop"() : () -> ()
    %c0_13 = arith.constant 0 : index
    %c0_14 = arith.constant 0 : index
    %30 = vector.load %arg5[%c0_13, %c0_14] : memref<96x1xf32, #tpu.memory_space<vmem>>, vector<96x1xf32>
    %31 = vector.broadcast %30 : vector<96x1xf32> to vector<96x8xf32>
    %32 = arith.addf %29, %31 : vector<96x8xf32>
    %33 = vector.extract_strided_slice %32 {offsets = [0, 0], sizes = [32, 8], strides = [1, 1]} : vector<96x8xf32> to vector<32x8xf32>
    %cst_15 = arith.constant 0.353553385 : f32
    %34 = vector.broadcast %cst_15 : f32 to vector<32x8xf32>
    %35 = arith.mulf %33, %34 : vector<32x8xf32>
    %36 = vector.extract_strided_slice %32 {offsets = [32, 0], sizes = [32, 8], strides = [1, 1]} : vector<96x8xf32> to vector<32x8xf32>
    %37 = vector.extract_strided_slice %32 {offsets = [64, 0], sizes = [32, 8], strides = [1, 1]} : vector<96x8xf32> to vector<32x8xf32>
    %38 = vector.shape_cast %35 : vector<32x8xf32> to vector<4x8x8xf32>
    %39 = vector.shape_cast %36 : vector<32x8xf32> to vector<4x8x8xf32>
    %40 = arith.truncf %39 : vector<4x8x8xf32> to vector<4x8x8xbf16>
    %41 = vector.shape_cast %37 : vector<32x8xf32> to vector<4x8x8xf32>
    %42 = arith.truncf %41 : vector<4x8x8xf32> to vector<4x8x8xbf16>
    %43 = tpu.transpose %38, [0, 2, 1] : vector<4x8x8xf32> -> vector<4x8x8xf32>
    %44 = arith.truncf %43 : vector<4x8x8xf32> to vector<4x8x8xbf16>
    "tpu.trace_start"() <{level = 10 : i32, message = "hqd,hdk->hqk"}> : () -> ()
    %cst_16 = arith.constant dense<0.000000e+00> : vector<4x8x8xf32>
    %45 = tpu.matmul %44, %40, %cst_16 {dimension_numbers = #tpu.dot_dimension_numbers<[2], [1], [1], [2], [0, 0, 0, 1, 1, 2], [0], [0]>} : vector<4x8x8xbf16>, vector<4x8x8xbf16>, vector<4x8x8xf32> -> vector<4x8x8xf32>
    "tpu.trace_stop"() : () -> ()
    %46 = tpu.iota {dimensions = array<i32: 0>} : vector<8x8xi32>
    %c0_i32 = arith.constant 0 : i32
    %47 = vector.broadcast %c0_i32 : i32 to vector<8x8xi32>
    %48 = arith.addi %46, %47 : vector<8x8xi32>
    %49 = tpu.iota {dimensions = array<i32: 1>} : vector<8x8xi32>
    %50 = arith.cmpi sgt, %49, %48 : vector<8x8xi32>
    %51 = vector.shape_cast %50 : vector<8x8xi1> to vector<1x8x8xi1>
    %cst_17 = arith.constant -1.000000e+30 : f32
    %52 = vector.shape_cast %51 : vector<1x8x8xi1> to vector<1x8x8xi1>
    %53 = vector.broadcast %52 : vector<1x8x8xi1> to vector<4x8x8xi1>
    %54 = vector.broadcast %cst_17 : f32 to vector<4x8x8xf32>
    %55 = arith.select %53, %54, %45 : vector<4x8x8xi1>, vector<4x8x8xf32>
    %cst_18 = arith.constant dense<0xFF800000> : vector<4x8xf32>
    %56 = vector.multi_reduction <maximumf>, %55, %cst_18 [2] : vector<4x8x8xf32> to vector<4x8xf32>
    %57 = vector.shape_cast %56 : vector<4x8xf32> to vector<4x8x1xf32>
    %58 = vector.broadcast %57 : vector<4x8x1xf32> to vector<4x8x8xf32>
    %59 = arith.subf %55, %58 : vector<4x8x8xf32>
    %60 = math.exp %59 : vector<4x8x8xf32>
    %cst_19 = arith.constant dense<0.000000e+00> : vector<4x8xf32>
    %61 = vector.multi_reduction <add>, %60, %cst_19 [2] : vector<4x8x8xf32> to vector<4x8xf32>
    %62 = vector.shape_cast %61 : vector<4x8xf32> to vector<4x8x1xf32>
    %63 = tpu.reciprocal %62 {approx = true} : vector<4x8x1xf32> -> vector<4x8x1xf32>
    %64 = vector.broadcast %63 : vector<4x8x1xf32> to vector<4x8x8xf32>
    %65 = arith.mulf %60, %64 : vector<4x8x8xf32>
    %66 = arith.truncf %65 : vector<4x8x8xf32> to vector<4x8x8xbf16>
    "tpu.trace_start"() <{level = 10 : i32, message = "hdk,hqk->hdq"}> : () -> ()
    %cst_20 = arith.constant dense<0.000000e+00> : vector<4x8x8xf32>
    %67 = tpu.matmul %42, %66, %cst_20 {dimension_numbers = #tpu.dot_dimension_numbers<[2], [2], [1], [1], [0, 0, 0, 1, 1, 1], [0], [0]>} : vector<4x8x8xbf16>, vector<4x8x8xbf16>, vector<4x8x8xf32> -> vector<4x8x8xf32>
    "tpu.trace_stop"() : () -> ()
    %68 = vector.shape_cast %67 : vector<4x8x8xf32> to vector<32x8xf32>
    %69 = tpu.transpose %68, [1, 0] : vector<32x8xf32> -> vector<8x32xf32>
    %70 = arith.truncf %69 : vector<8x32xf32> to vector<8x32xbf16>
    %c0_21 = arith.constant 0 : index
    %c0_22 = arith.constant 0 : index
    %71 = vector.load %arg6[%c0_21, %c0_22] : memref<32x32xbf16, #tpu.memory_space<vmem>>, vector<32x32xbf16>
    %cst_23 = arith.constant dense<0.000000e+00> : vector<8x32xf32>
    %72 = tpu.matmul %70, %71, %cst_23 {dimension_numbers = #tpu.dot_dimension_numbers<[1], [0], [0], [1], [0, 0, 1, 1], [], []>} : vector<8x32xbf16>, vector<32x32xbf16>, vector<8x32xf32> -> vector<8x32xf32>
    %73 = arith.addf %2, %72 : vector<8x32xf32>
    %c0_24 = arith.constant 0 : index
    %c0_25 = arith.constant 0 : index
    %74 = vector.load %arg7[%c0_24, %c0_25] : memref<1x32xf32, #tpu.memory_space<vmem>>, vector<1x32xf32>
    %75 = vector.broadcast %74 : vector<1x32xf32> to vector<8x32xf32>
    %76 = arith.addf %73, %75 : vector<8x32xf32>
    %c0_26 = arith.constant 0 : index
    %c0_27 = arith.constant 0 : index
    %77 = vector.load %arg8[%c0_26, %c0_27] : memref<1x32xf32, #tpu.memory_space<vmem>>, vector<1x32xf32>
    %c0_28 = arith.constant 0 : index
    %c0_29 = arith.constant 0 : index
    %78 = vector.load %arg9[%c0_28, %c0_29] : memref<1x32xf32, #tpu.memory_space<vmem>>, vector<1x32xf32>
    %cst_30 = arith.constant dense<0.000000e+00> : vector<8xf32>
    %79 = vector.multi_reduction <add>, %76, %cst_30 [1] : vector<8x32xf32> to vector<8xf32>
    %80 = vector.shape_cast %79 : vector<8xf32> to vector<8x1xf32>
    %cst_31 = arith.constant 3.200000e+01 : f32
    %81 = vector.broadcast %cst_31 : f32 to vector<8x1xf32>
    %82 = arith.divf %80, %81 : vector<8x1xf32>
    %83 = vector.broadcast %82 : vector<8x1xf32> to vector<8x32xf32>
    %84 = arith.subf %76, %83 : vector<8x32xf32>
    %85 = arith.mulf %84, %84 : vector<8x32xf32>
    %cst_32 = arith.constant dense<0.000000e+00> : vector<8xf32>
    %86 = vector.multi_reduction <add>, %85, %cst_32 [1] : vector<8x32xf32> to vector<8xf32>
    %87 = vector.shape_cast %86 : vector<8xf32> to vector<8x1xf32>
    %cst_33 = arith.constant 3.200000e+01 : f32
    %88 = vector.broadcast %cst_33 : f32 to vector<8x1xf32>
    %89 = arith.divf %87, %88 : vector<8x1xf32>
    %90 = vector.broadcast %82 : vector<8x1xf32> to vector<8x32xf32>
    %91 = arith.subf %76, %90 : vector<8x32xf32>
    %cst_34 = arith.constant 9.99999974E-6 : f32
    %92 = vector.broadcast %cst_34 : f32 to vector<8x1xf32>
    %93 = arith.addf %89, %92 : vector<8x1xf32>
    %94 = math.rsqrt %93 : vector<8x1xf32>
    %95 = vector.broadcast %94 : vector<8x1xf32> to vector<8x32xf32>
    %96 = arith.mulf %91, %95 : vector<8x32xf32>
    %97 = vector.broadcast %77 : vector<1x32xf32> to vector<8x32xf32>
    %98 = arith.mulf %96, %97 : vector<8x32xf32>
    %99 = vector.broadcast %78 : vector<1x32xf32> to vector<8x32xf32>
    %100 = arith.addf %98, %99 : vector<8x32xf32>
    %101 = arith.truncf %100 : vector<8x32xf32> to vector<8x32xbf16>
    %c0_35 = arith.constant 0 : index
    %c0_36 = arith.constant 0 : index
    %102 = vector.load %arg10[%c0_35, %c0_36] : memref<32x128xbf16, #tpu.memory_space<vmem>>, vector<32x128xbf16>
    %cst_37 = arith.constant dense<0.000000e+00> : vector<8x128xf32>
    %103 = tpu.matmul %101, %102, %cst_37 {dimension_numbers = #tpu.dot_dimension_numbers<[1], [0], [0], [1], [0, 0, 1, 1], [], []>} : vector<8x32xbf16>, vector<32x128xbf16>, vector<8x128xf32> -> vector<8x128xf32>
    %c0_38 = arith.constant 0 : index
    %c0_39 = arith.constant 0 : index
    %104 = vector.load %arg11[%c0_38, %c0_39] : memref<1x128xf32, #tpu.memory_space<vmem>>, vector<1x128xf32>
    %105 = vector.broadcast %104 : vector<1x128xf32> to vector<8x128xf32>
    %106 = arith.addf %103, %105 : vector<8x128xf32>
    %107 = arith.mulf %106, %106 : vector<8x128xf32>
    %108 = arith.mulf %106, %107 : vector<8x128xf32>
    %cst_40 = arith.constant 4.471500e-02 : f32
    %109 = vector.broadcast %cst_40 : f32 to vector<8x128xf32>
    %110 = arith.mulf %109, %108 : vector<8x128xf32>
    %111 = arith.addf %106, %110 : vector<8x128xf32>
    %cst_41 = arith.constant 0.797884583 : f32
    %112 = vector.broadcast %cst_41 : f32 to vector<8x128xf32>
    %113 = arith.mulf %112, %111 : vector<8x128xf32>
    %114 = math.tanh %113 : vector<8x128xf32>
    %cst_42 = arith.constant 1.000000e+00 : f32
    %115 = vector.broadcast %cst_42 : f32 to vector<8x128xf32>
    %116 = arith.addf %115, %114 : vector<8x128xf32>
    %cst_43 = arith.constant 5.000000e-01 : f32
    %117 = vector.broadcast %cst_43 : f32 to vector<8x128xf32>
    %118 = arith.mulf %117, %116 : vector<8x128xf32>
    %119 = arith.mulf %106, %118 : vector<8x128xf32>
    %120 = arith.truncf %119 : vector<8x128xf32> to vector<8x128xbf16>
    %c0_44 = arith.constant 0 : index
    %c0_45 = arith.constant 0 : index
    %121 = vector.load %arg12[%c0_44, %c0_45] : memref<128x32xbf16, #tpu.memory_space<vmem>>, vector<128x32xbf16>
    %cst_46 = arith.constant dense<0.000000e+00> : vector<8x32xf32>
    %122 = tpu.matmul %120, %121, %cst_46 {dimension_numbers = #tpu.dot_dimension_numbers<[1], [0], [0], [1], [0, 0, 1, 1], [], []>} : vector<8x128xbf16>, vector<128x32xbf16>, vector<8x32xf32> -> vector<8x32xf32>
    %123 = arith.addf %76, %122 : vector<8x32xf32>
    %c0_47 = arith.constant 0 : index
    %c0_48 = arith.constant 0 : index
    %124 = vector.load %arg13[%c0_47, %c0_48] : memref<1x32xf32, #tpu.memory_space<vmem>>, vector<1x32xf32>
    %125 = vector.broadcast %124 : vector<1x32xf32> to vector<8x32xf32>
    %126 = arith.addf %123, %125 : vector<8x32xf32>
    %127 = arith.truncf %126 : vector<8x32xf32> to vector<8x32xbf16>
    %c0_49 = arith.constant 0 : index
    %c0_50 = arith.constant 0 : index
    %c0_51 = arith.constant 0 : index
    %128 = vector.load %arg16[%c0_49, %c0_50, %c0_51] : memref<1x8x32xbf16, #tpu.memory_space<vmem>>, vector<1x8x32xbf16>
    %129 = vector.shape_cast %128 : vector<1x8x32xbf16> to vector<8x32xbf16>
    %130 = vector.shape_cast %127 : vector<8x32xbf16> to vector<1x8x32xbf16>
    tpu.vector_store %arg16[%c0_49, %c0_50, %c0_51], %130 {strides = array<i32>} : memref<1x8x32xbf16, #tpu.memory_space<vmem>>, vector<1x8x32xbf16>,
    return
  }
  func.func @transform_0(%arg0: i32) -> (i32, i32, i32) {
    %c0_i32 = arith.constant 0 : i32
    %c0_i32_0 = arith.constant 0 : i32
    %c0_i32_1 = arith.constant 0 : i32
    return %arg0, %c0_i32, %c0_i32_0 : i32, i32, i32
  }
  func.func @transform_1(%arg0: i32) -> (i32, i32) {
    %c0_i32 = arith.constant 0 : i32
    %c0_i32_0 = arith.constant 0 : i32
    %c0_i32_1 = arith.constant 0 : i32
    return %c0_i32, %c0_i32_0 : i32, i32
  }
  func.func @transform_2(%arg0: i32) -> (i32, i32) {
    %c0_i32 = arith.constant 0 : i32
    %c0_i32_0 = arith.constant 0 : i32
    %c0_i32_1 = arith.constant 0 : i32
    return %c0_i32, %c0_i32_0 : i32, i32
  }
  func.func @transform_3(%arg0: i32) -> (i32, i32) {
    %c0_i32 = arith.constant 0 : i32
    %c0_i32_0 = arith.constant 0 : i32
    %c0_i32_1 = arith.constant 0 : i32
    return %c0_i32, %c0_i32_0 : i32, i32
  }
  func.func @transform_4(%arg0: i32) -> (i32, i32) {
    %c0_i32 = arith.constant 0 : i32
    %c0_i32_0 = arith.constant 0 : i32
    %c0_i32_1 = arith.constant 0 : i32
    return %c0_i32, %c0_i32_0 : i32, i32
  }
  func.func @transform_5(%arg0: i32) -> (i32, i32) {
    %c0_i32 = arith.constant 0 : i32
    %c0_i32_0 = arith.constant 0 : i32
    %c0_i32_1 = arith.constant 0 : i32
    return %c0_i32, %c0_i32_0 : i32, i32
  }
  func.func @transform_6(%arg0: i32) -> (i32, i32) {
    %c0_i32 = arith.constant 0 : i32
    %c0_i32_0 = arith.constant 0 : i32
    %c0_i32_1 = arith.constant 0 : i32
    return %c0_i32, %c0_i32_0 : i32, i32
  }
  func.func @transform_7(%arg0: i32) -> (i32, i32) {
    %c0_i32 = arith.constant 0 : i32
    %c0_i32_0 = arith.constant 0 : i32
    %c0_i32_1 = arith.constant 0 : i32
    return %c0_i32, %c0_i32_0 : i32, i32
  }
  func.func @transform_8(%arg0: i32) -> (i32, i32) {
    %c0_i32 = arith.constant 0 : i32
    %c0_i32_0 = arith.constant 0 : i32
    %c0_i32_1 = arith.constant 0 : i32
    return %c0_i32, %c0_i32_0 : i32, i32
  }
  func.func @transform_9(%arg0: i32) -> (i32, i32) {
    %c0_i32 = arith.constant 0 : i32
    %c0_i32_0 = arith.constant 0 : i32
    %c0_i32_1 = arith.constant 0 : i32
    return %c0_i32, %c0_i32_0 : i32, i32
  }
  func.func @transform_10(%arg0: i32) -> (i32, i32) {
    %c0_i32 = arith.constant 0 : i32
    %c0_i32_0 = arith.constant 0 : i32
    %c0_i32_1 = arith.constant 0 : i32
    return %c0_i32, %c0_i32_0 : i32, i32
  }
  func.func @transform_11(%arg0: i32) -> (i32, i32) {
    %c0_i32 = arith.constant 0 : i32
    %c0_i32_0 = arith.constant 0 : i32
    %c0_i32_1 = arith.constant 0 : i32
    return %c0_i32, %c0_i32_0 : i32, i32
  }
  func.func @transform_12(%arg0: i32) -> (i32, i32) {
    %c0_i32 = arith.constant 0 : i32
    %c0_i32_0 = arith.constant 0 : i32
    %c0_i32_1 = arith.constant 0 : i32
    return %c0_i32, %c0_i32_0 : i32, i32
  }
  func.func @transform_13(%arg0: i32) -> (i32, i32) {
    %c0_i32 = arith.constant 0 : i32
    %c0_i32_0 = arith.constant 0 : i32
    %c0_i32_1 = arith.constant 0 : i32
    return %c0_i32, %c0_i32_0 : i32, i32
  }
  func.func @transform_14(%arg0: i32) -> (i32, i32) {
    %c0_i32 = arith.constant 0 : i32
    %c0_i32_0 = arith.constant 0 : i32
    %c0_i32_1 = arith.constant 0 : i32
    return %c0_i32, %c0_i32_0 : i32, i32
  }
  func.func @transform_15(%arg0: i32) -> (i32, i32, i32) {
    %c0_i32 = arith.constant 0 : i32
    %c0_i32_0 = arith.constant 0 : i32
    %c0_i32_1 = arith.constant 0 : i32
    return %arg0, %c0_i32, %c0_i32_0 : i32, i32, i32
  }
}

</mosaic_0001>

<llo_original>
// kernel: tpu_custom_call.1
$region0: #{tpu_custom_call.1}
  #allocation0 [shape = 'u32[]', space=smem, size = 0x4, offset = 0x4, fixed_abs, tag = 'smem constant byte address 0x4 - core index']
  #allocation1 [shape = 'u32[144,128]{1,0:T(1,128)}', space=vmem, size = 0x12000, scoped, tag = 'internal scratch']
  %s0 = inlined_call_operand.vmem [shape: bf16[2,8,32], index: 0, kind: input, shape index: {}]
  %s1 = inlined_call_operand.vmem [shape: f32[1,32], index: 1, kind: input, shape index: {}]
  %s2 = inlined_call_operand.vmem [shape: f32[1,32], index: 2, kind: input, shape index: {}]
  %s3 = inlined_call_operand.vmem [shape: bf16[96,32], index: 3, kind: input, shape index: {}]
  %s4 = inlined_call_operand.vmem [shape: f32[96,1], index: 4, kind: input, shape index: {}]
  %s5 = inlined_call_operand.vmem [shape: bf16[32,32], index: 5, kind: input, shape index: {}]
  %s6 = inlined_call_operand.vmem [shape: f32[1,32], index: 6, kind: input, shape index: {}]
  %s7 = inlined_call_operand.vmem [shape: f32[1,32], index: 7, kind: input, shape index: {}]
  %s8 = inlined_call_operand.vmem [shape: f32[1,32], index: 8, kind: input, shape index: {}]
  %s9 = inlined_call_operand.vmem [shape: bf16[32,128], index: 9, kind: input, shape index: {}]
  %s10 = inlined_call_operand.vmem [shape: f32[1,128], index: 10, kind: input, shape index: {}]
  %s11 = inlined_call_operand.vmem [shape: bf16[128,32], index: 11, kind: input, shape index: {}]
  %s12 = inlined_call_operand.vmem [shape: f32[1,32], index: 12, kind: input, shape index: {}]
  %s13 = inlined_call_operand.vmem [shape: f32[1,32], index: 13, kind: input, shape index: {}]
  %s14 = inlined_call_operand.vmem [shape: f32[1,32], index: 14, kind: input, shape index: {}]
  %s15 = inlined_call_operand.hbm [shape: bf16[2,8,32], index: 15, kind: output, shape index: {}]
  %s16 = sld [smem:[#allocation0]]
  $region93: #{tpu_custom_call.1} parent=0
    _
  %s18 = ssub.s32 1, %s16
  %s19 = scalar_select 0, %s18, %s16
  $region1: #{tpu_custom_call.1} parent=0
    #allocation2 [shape = 'u8[4096]{0}', space=vmem, size = 0x1000, scoped, tag = 'output window, operand 0']
    #allocation3 [shape = 's32[2]{0}', space=sflag, size = 0x8, scoped, tag = 'scoped memory for tpu_custom_call.1']
    %20 = vsyncpa [#allocation3], 0
    %s21 = scalar_lea.sflag [#allocation3], 1
    %22 = vsyncpa %s21, 0
    loop: start=0, step=1, limit=4
    $region2: #{tpu_custom_call.1} parent=1 // loop_pre_header
      _
    $region3: #{tpu_custom_call.1} parent=1 // loop_header
      %s24 = sphi 0, %s28
      %p25 = scmp.ge.s32.totalorder %s24, 4
      %s34 = sphi 0, %s36
      %s37 = sphi 0, %s34
      %s38 = sphi 0, %s37
      %s54 = sphi 0, %s38
      %s58 = sphi 0, %s58
      %s60 = sphi 0, %s58
      %s61 = sphi 0, %s60
      %s75 = sphi 0, %s61
      %s79 = sphi 0, %s79
      %s81 = sphi 0, %s79
      %s82 = sphi 0, %s81
      %s96 = sphi 0, %s82
      %s100 = sphi 0, %s100
      %s102 = sphi 0, %s100
      %s103 = sphi 0, %s102
      %s117 = sphi 0, %s103
      %s121 = sphi 0, %s121
      %s123 = sphi 0, %s121
      %s124 = sphi 0, %s123
      %s138 = sphi 0, %s124
      %s142 = sphi 0, %s142
      %s144 = sphi 0, %s142
      %s145 = sphi 0, %s144
      %s159 = sphi 0, %s145
      %s163 = sphi 0, %s163
      %s165 = sphi 0, %s163
      %s166 = sphi 0, %s165
      %s180 = sphi 0, %s166
      %s184 = sphi 0, %s184
      %s186 = sphi 0, %s184
      %s187 = sphi 0, %s186
      %s201 = sphi 0, %s187
      %s205 = sphi 0, %s205
      %s207 = sphi 0, %s205
      %s208 = sphi 0, %s207
      %s222 = sphi 0, %s208
      %s226 = sphi 0, %s226
      %s228 = sphi 0, %s226
      %s229 = sphi 0, %s228
      %s243 = sphi 0, %s229
      %s247 = sphi 0, %s247
      %s249 = sphi 0, %s247
      %s250 = sphi 0, %s249
      %s264 = sphi 0, %s250
      %s268 = sphi 0, %s268
      %s270 = sphi 0, %s268
      %s271 = sphi 0, %s270
      %s285 = sphi 0, %s271
      %s289 = sphi 0, %s289
      %s291 = sphi 0, %s289
      %s292 = sphi 0, %s291
      %s306 = sphi 0, %s292
      %s310 = sphi 0, %s310
      %s312 = sphi 0, %s310
      %s313 = sphi 0, %s312
      %s327 = sphi 0, %s313
      %s331 = sphi 0, %s331
      %s333 = sphi 0, %s331
      %s334 = sphi 0, %s333
      %s348 = sphi 0, %s334
      %s354 = sphi 0, %s356
      %s357 = sphi 0, %s354
      %s358 = sphi 0, %s357
      %s374 = sphi 0, %s358
    $region4: #{tpu_custom_call.1} parent=1 // loop_header_branch
      %27 = sbr.rel (%p25) target = $region8
    $region5: #{tpu_custom_call.1} parent=1 // loop_body
      %s29 = ssub.s32 %s24, 1
      %s30 = ssub.s32 %s24, 2
      %s31 = sadd.s32 %s24, 1
      %s32 = ssub.s32 %s24, %s31
      %p33 = scmp.eq.s32.totalorder %s32, 0
      %s35 = sadd.s32 %s34, 1
      %s36 = scalar_select %p33, %s34, %s35
      %p39 = pneg %p33
      %p40 = scmp.eq.s32.totalorder %s24, 1
      %p41 = por %p39, %p40
      %p42 = scmp.ne.s32.totalorder %s34, %s37
      %p43 = scmp.eq.s32.totalorder %s24, 0
      %p44 = por %p42, %p43
      %p45 = scmp.ne.s32.totalorder %s34, %s37
      %p46 = scmp.eq.s32.totalorder %s29, 1
      %p47 = por %p45, %p46
      %p48 = scmp.ne.s32.totalorder %s37, %s38
      %p49 = scmp.eq.s32.totalorder %s29, 0
      %p50 = por %p48, %p49
      %p51 = scmp.ne.s32.totalorder %s37, %s38
      %p52 = scmp.eq.s32.totalorder %s30, 1
      %p53 = por %p51, %p52
      %p55 = scmp.ne.s32.totalorder %s38, %s54
      %p56 = scmp.eq.s32.totalorder %s30, 0
      %p57 = por %p55, %p56
      %s59 = sadd.s32 %s58, 1
      %p62 = scmp.eq.s32.totalorder %s24, 1
      %p63 = scmp.ne.s32.totalorder %s58, %s60
      %p64 = scmp.eq.s32.totalorder %s24, 0
      %p65 = por %p63, %p64
      %p66 = scmp.ne.s32.totalorder %s58, %s60
      %p67 = scmp.eq.s32.totalorder %s29, 1
      %p68 = por %p66, %p67
      %p69 = scmp.ne.s32.totalorder %s60, %s61
      %p70 = scmp.eq.s32.totalorder %s29, 0
      %p71 = por %p69, %p70
      %p72 = scmp.ne.s32.totalorder %s60, %s61
      %p73 = scmp.eq.s32.totalorder %s30, 1
      %p74 = por %p72, %p73
      %p76 = scmp.ne.s32.totalorder %s61, %s75
      %p77 = scmp.eq.s32.totalorder %s30, 0
      %p78 = por %p76, %p77
      %s80 = sadd.s32 %s79, 1
      %p83 = scmp.eq.s32.totalorder %s24, 1
      %p84 = scmp.ne.s32.totalorder %s79, %s81
      %p85 = scmp.eq.s32.totalorder %s24, 0
      %p86 = por %p84, %p85
      %p87 = scmp.ne.s32.totalorder %s79, %s81
      %p88 = scmp.eq.s32.totalorder %s29, 1
      %p89 = por %p87, %p88
      %p90 = scmp.ne.s32.totalorder %s81, %s82
      %p91 = scmp.eq.s32.totalorder %s29, 0
      %p92 = por %p90, %p91
      %p93 = scmp.ne.s32.totalorder %s81, %s82
      %p94 = scmp.eq.s32.totalorder %s30, 1
      %p95 = por %p93, %p94
      %p97 = scmp.ne.s32.totalorder %s82, %s96
      %p98 = scmp.eq.s32.totalorder %s30, 0
      %p99 = por %p97, %p98
      %s101 = sadd.s32 %s100, 1
      %p104 = scmp.eq.s32.totalorder %s24, 1
      %p105 = scmp.ne.s32.totalorder %s100, %s102
      %p106 = scmp.eq.s32.totalorder %s24, 0
      %p107 = por %p105, %p106
      %p108 = scmp.ne.s32.totalorder %s100, %s102
      %p109 = scmp.eq.s32.totalorder %s29, 1
      %p110 = por %p108, %p109
      %p111 = scmp.ne.s32.totalorder %s102, %s103
      %p112 = scmp.eq.s32.totalorder %s29, 0
      %p113 = por %p111, %p112
      %p114 = scmp.ne.s32.totalorder %s102, %s103
      %p115 = scmp.eq.s32.totalorder %s30, 1
      %p116 = por %p114, %p115
      %p118 = scmp.ne.s32.totalorder %s103, %s117
      %p119 = scmp.eq.s32.totalorder %s30, 0
      %p120 = por %p118, %p119
      %s122 = sadd.s32 %s121, 1
      %p125 = scmp.eq.s32.totalorder %s24, 1
      %p126 = scmp.ne.s32.totalorder %s121, %s123
      %p127 = scmp.eq.s32.totalorder %s24, 0
      %p128 = por %p126, %p127
      %p129 = scmp.ne.s32.totalorder %s121, %s123
      %p130 = scmp.eq.s32.totalorder %s29, 1
      %p131 = por %p129, %p130
      %p132 = scmp.ne.s32.totalorder %s123, %s124
      %p133 = scmp.eq.s32.totalorder %s29, 0
      %p134 = por %p132, %p133
      %p135 = scmp.ne.s32.totalorder %s123, %s124
      %p136 = scmp.eq.s32.totalorder %s30, 1
      %p137 = por %p135, %p136
      %p139 = scmp.ne.s32.totalorder %s124, %s138
      %p140 = scmp.eq.s32.totalorder %s30, 0
      %p141 = por %p139, %p140
      %s143 = sadd.s32 %s142, 1
      %p146 = scmp.eq.s32.totalorder %s24, 1
      %p147 = scmp.ne.s32.totalorder %s142, %s144
      %p148 = scmp.eq.s32.totalorder %s24, 0
      %p149 = por %p147, %p148
      %p150 = scmp.ne.s32.totalorder %s142, %s144
      %p151 = scmp.eq.s32.totalorder %s29, 1
      %p152 = por %p150, %p151
      %p153 = scmp.ne.s32.totalorder %s144, %s145
      %p154 = scmp.eq.s32.totalorder %s29, 0
      %p155 = por %p153, %p154
      %p156 = scmp.ne.s32.totalorder %s144, %s145
      %p157 = scmp.eq.s32.totalorder %s30, 1
      %p158 = por %p156, %p157
      %p160 = scmp.ne.s32.totalorder %s145, %s159
      %p161 = scmp.eq.s32.totalorder %s30, 0
      %p162 = por %p160, %p161
      %s164 = sadd.s32 %s163, 1
      %p167 = scmp.eq.s32.totalorder %s24, 1
      %p168 = scmp.ne.s32.totalorder %s163, %s165
      %p169 = scmp.eq.s32.totalorder %s24, 0
      %p170 = por %p168, %p169
      %p171 = scmp.ne.s32.totalorder %s163, %s165
      %p172 = scmp.eq.s32.totalorder %s29, 1
      %p173 = por %p171, %p172
      %p174 = scmp.ne.s32.totalorder %s165, %s166
      %p175 = scmp.eq.s32.totalorder %s29, 0
      %p176 = por %p174, %p175
      %p177 = scmp.ne.s32.totalorder %s165, %s166
      %p178 = scmp.eq.s32.totalorder %s30, 1
      %p179 = por %p177, %p178
      %p181 = scmp.ne.s32.totalorder %s166, %s180
      %p182 = scmp.eq.s32.totalorder %s30, 0
      %p183 = por %p181, %p182
      %s185 = sadd.s32 %s184, 1
      %p188 = scmp.eq.s32.totalorder %s24, 1
      %p189 = scmp.ne.s32.totalorder %s184, %s186
      %p190 = scmp.eq.s32.totalorder %s24, 0
      %p191 = por %p189, %p190
      %p192 = scmp.ne.s32.totalorder %s184, %s186
      %p193 = scmp.eq.s32.totalorder %s29, 1
      %p194 = por %p192, %p193
      %p195 = scmp.ne.s32.totalorder %s186, %s187
      %p196 = scmp.eq.s32.totalorder %s29, 0
      %p197 = por %p195, %p196
      %p198 = scmp.ne.s32.totalorder %s186, %s187
      %p199 = scmp.eq.s32.totalorder %s30, 1
      %p200 = por %p198, %p199
      %p202 = scmp.ne.s32.totalorder %s187, %s201
      %p203 = scmp.eq.s32.totalorder %s30, 0
      %p204 = por %p202, %p203
      %s206 = sadd.s32 %s205, 1
      %p209 = scmp.eq.s32.totalorder %s24, 1
      %p210 = scmp.ne.s32.totalorder %s205, %s207
      %p211 = scmp.eq.s32.totalorder %s24, 0
      %p212 = por %p210, %p211
      %p213 = scmp.ne.s32.totalorder %s205, %s207
      %p214 = scmp.eq.s32.totalorder %s29, 1
      %p215 = por %p213, %p214
      %p216 = scmp.ne.s32.totalorder %s207, %s208
      %p217 = scmp.eq.s32.totalorder %s29, 0
      %p218 = por %p216, %p217
      %p219 = scmp.ne.s32.totalorder %s207, %s208
      %p220 = scmp.eq.s32.totalorder %s30, 1
      %p221 = por %p219, %p220
      %p223 = scmp.ne.s32.totalorder %s208, %s222
      %p224 = scmp.eq.s32.totalorder %s30, 0
      %p225 = por %p223, %p224
      %s227 = sadd.s32 %s226, 1
      %p230 = scmp.eq.s32.totalorder %s24, 1
      %p231 = scmp.ne.s32.totalorder %s226, %s228
      %p232 = scmp.eq.s32.totalorder %s24, 0
      %p233 = por %p231, %p232
      %p234 = scmp.ne.s32.totalorder %s226, %s228
      %p235 = scmp.eq.s32.totalorder %s29, 1
      %p236 = por %p234, %p235
      %p237 = scmp.ne.s32.totalorder %s228, %s229
      %p238 = scmp.eq.s32.totalorder %s29, 0
      %p239 = por %p237, %p238
      %p240 = scmp.ne.s32.totalorder %s228, %s229
      %p241 = scmp.eq.s32.totalorder %s30, 1
      %p242 = por %p240, %p241
      %p244 = scmp.ne.s32.totalorder %s229, %s243
      %p245 = scmp.eq.s32.totalorder %s30, 0
      %p246 = por %p244, %p245
      %s248 = sadd.s32 %s247, 1
      %p251 = scmp.eq.s32.totalorder %s24, 1
      %p252 = scmp.ne.s32.totalorder %s247, %s249
      %p253 = scmp.eq.s32.totalorder %s24, 0
      %p254 = por %p252, %p253
      %p255 = scmp.ne.s32.totalorder %s247, %s249
      %p256 = scmp.eq.s32.totalorder %s29, 1
      %p257 = por %p255, %p256
      %p258 = scmp.ne.s32.totalorder %s249, %s250
      %p259 = scmp.eq.s32.totalorder %s29, 0
      %p260 = por %p258, %p259
      %p261 = scmp.ne.s32.totalorder %s249, %s250
      %p262 = scmp.eq.s32.totalorder %s30, 1
      %p263 = por %p261, %p262
      %p265 = scmp.ne.s32.totalorder %s250, %s264
      %p266 = scmp.eq.s32.totalorder %s30, 0
      %p267 = por %p265, %p266
      %s269 = sadd.s32 %s268, 1
      %p272 = scmp.eq.s32.totalorder %s24, 1
      %p273 = scmp.ne.s32.totalorder %s268, %s270
      %p274 = scmp.eq.s32.totalorder %s24, 0
      %p275 = por %p273, %p274
      %p276 = scmp.ne.s32.totalorder %s268, %s270
      %p277 = scmp.eq.s32.totalorder %s29, 1
      %p278 = por %p276, %p277
      %p279 = scmp.ne.s32.totalorder %s270, %s271
      %p280 = scmp.eq.s32.totalorder %s29, 0
      %p281 = por %p279, %p280
      %p282 = scmp.ne.s32.totalorder %s270, %s271
      %p283 = scmp.eq.s32.totalorder %s30, 1
      %p284 = por %p282, %p283
      %p286 = scmp.ne.s32.totalorder %s271, %s285
      %p287 = scmp.eq.s32.totalorder %s30, 0
      %p288 = por %p286, %p287
      %s290 = sadd.s32 %s289, 1
      %p293 = scmp.eq.s32.totalorder %s24, 1
      %p294 = scmp.ne.s32.totalorder %s289, %s291
      %p295 = scmp.eq.s32.totalorder %s24, 0
      %p296 = por %p294, %p295
      %p297 = scmp.ne.s32.totalorder %s289, %s291
      %p298 = scmp.eq.s32.totalorder %s29, 1
      %p299 = por %p297, %p298
      %p300 = scmp.ne.s32.totalorder %s291, %s292
      %p301 = scmp.eq.s32.totalorder %s29, 0
      %p302 = por %p300, %p301
      %p303 = scmp.ne.s32.totalorder %s291, %s292
      %p304 = scmp.eq.s32.totalorder %s30, 1
      %p305 = por %p303, %p304
      %p307 = scmp.ne.s32.totalorder %s292, %s306
      %p308 = scmp.eq.s32.totalorder %s30, 0
      %p309 = por %p307, %p308
      %s311 = sadd.s32 %s310, 1
      %p314 = scmp.eq.s32.totalorder %s24, 1
      %p315 = scmp.ne.s32.totalorder %s310, %s312
      %p316 = scmp.eq.s32.totalorder %s24, 0
      %p317 = por %p315, %p316
      %p318 = scmp.ne.s32.totalorder %s310, %s312
      %p319 = scmp.eq.s32.totalorder %s29, 1
      %p320 = por %p318, %p319
      %p321 = scmp.ne.s32.totalorder %s312, %s313
      %p322 = scmp.eq.s32.totalorder %s29, 0
      %p323 = por %p321, %p322
      %p324 = scmp.ne.s32.totalorder %s312, %s313
      %p325 = scmp.eq.s32.totalorder %s30, 1
      %p326 = por %p324, %p325
      %p328 = scmp.ne.s32.totalorder %s313, %s327
      %p329 = scmp.eq.s32.totalorder %s30, 0
      %p330 = por %p328, %p329
      %s332 = sadd.s32 %s331, 1
      %p335 = scmp.eq.s32.totalorder %s24, 1
      %p336 = scmp.ne.s32.totalorder %s331, %s333
      %p337 = scmp.eq.s32.totalorder %s24, 0
      %p338 = por %p336, %p337
      %p339 = scmp.ne.s32.totalorder %s331, %s333
      %p340 = scmp.eq.s32.totalorder %s29, 1
      %p341 = por %p339, %p340
      %p342 = scmp.ne.s32.totalorder %s333, %s334
      %p343 = scmp.eq.s32.totalorder %s29, 0
      %p344 = por %p342, %p343
      %p345 = scmp.ne.s32.totalorder %s333, %s334
      %p346 = scmp.eq.s32.totalorder %s30, 1
      %p347 = por %p345, %p346
      %p349 = scmp.ne.s32.totalorder %s334, %s348
      %p350 = scmp.eq.s32.totalorder %s30, 0
      %p351 = por %p349, %p350
      %s352 = ssub.s32 %s24, %s31
      %p353 = scmp.eq.s32.totalorder %s352, 0
      %s355 = sadd.s32 %s354, 1
      %s356 = scalar_select %p353, %s354, %s355
      %p359 = pneg %p353
      %p360 = scmp.eq.s32.totalorder %s24, 1
      %p361 = por %p359, %p360
      %p362 = scmp.ne.s32.totalorder %s354, %s357
      %p363 = scmp.eq.s32.totalorder %s24, 0
      %p364 = por %p362, %p363
      %p365 = scmp.ne.s32.totalorder %s354, %s357
      %p366 = scmp.eq.s32.totalorder %s29, 1
      %p367 = por %p365, %p366
      %p368 = scmp.ne.s32.totalorder %s357, %s358
      %p369 = scmp.eq.s32.totalorder %s29, 0
      %p370 = por %p368, %p369
      %p371 = scmp.ne.s32.totalorder %s357, %s358
      %p372 = scmp.eq.s32.totalorder %s30, 1
      %p373 = por %p371, %p372
      %p375 = scmp.ne.s32.totalorder %s358, %s374
      %p376 = scmp.eq.s32.totalorder %s30, 0
      %p377 = por %p375, %p376
      %p378 = scmp.le.s32.totalorder 1, %s24
      %p379 = scmp.lt.s32.totalorder %s24, 3
      %p380 = pnand %p378, %p379
      %p381 = pneg %p380
      // Predicated region
      $region9: #{tpu_custom_call.1} parent=5 // pred_check
        _
      $region10: #{tpu_custom_call.1} parent=5 // pred_check_branch
        %383 = sbr.rel (%p380) target = $region12
      $region11: #{tpu_custom_call.1} parent=5 // pred_region
        %s384 = ssub.s32 %s24, 1
        // Predicated region
        $region13: #{tpu_custom_call.1} parent=11 // pred_check
          %p385 = pneg %p71
        $region14: #{tpu_custom_call.1} parent=11 // pred_check_branch
          %387 = sbr.rel (%p385) target = $region16
        $region15: #{tpu_custom_call.1} parent=11 // pred_region
          _
        $region16: #{tpu_custom_call.1} parent=11 // pred_fallthru
          _
        // Predicated region
        $region17: #{tpu_custom_call.1} parent=11 // pred_check
          %p388 = pneg %p92
        $region18: #{tpu_custom_call.1} parent=11 // pred_check_branch
          %390 = sbr.rel (%p388) target = $region20
        $region19: #{tpu_custom_call.1} parent=11 // pred_region
          _
        $region20: #{tpu_custom_call.1} parent=11 // pred_fallthru
          _
        // Predicated region
        $region21: #{tpu_custom_call.1} parent=11 // pred_check
          %p391 = pneg %p113
        $region22: #{tpu_custom_call.1} parent=11 // pred_check_branch
          %393 = sbr.rel (%p391) target = $region24
        $region23: #{tpu_custom_call.1} parent=11 // pred_region
          _
        $region24: #{tpu_custom_call.1} parent=11 // pred_fallthru
          _
        // Predicated region
        $region25: #{tpu_custom_call.1} parent=11 // pred_check
          %p394 = pneg %p134
        $region26: #{tpu_custom_call.1} parent=11 // pred_check_branch
          %396 = sbr.rel (%p394) target = $region28
        $region27: #{tpu_custom_call.1} parent=11 // pred_region
          _
        $region28: #{tpu_custom_call.1} parent=11 // pred_fallthru
          _
        // Predicated region
        $region29: #{tpu_custom_call.1} parent=11 // pred_check
          %p397 = pneg %p155
        $region30: #{tpu_custom_call.1} parent=11 // pred_check_branch
          %399 = sbr.rel (%p397) target = $region32
        $region31: #{tpu_custom_call.1} parent=11 // pred_region
          _
        $region32: #{tpu_custom_call.1} parent=11 // pred_fallthru
          _
        // Predicated region
        $region33: #{tpu_custom_call.1} parent=11 // pred_check
          %p400 = pneg %p176
        $region34: #{tpu_custom_call.1} parent=11 // pred_check_branch
          %402 = sbr.rel (%p400) target = $region36
        $region35: #{tpu_custom_call.1} parent=11 // pred_region
          _
        $region36: #{tpu_custom_call.1} parent=11 // pred_fallthru
          _
        // Predicated region
        $region37: #{tpu_custom_call.1} parent=11 // pred_check
          %p403 = pneg %p197
        $region38: #{tpu_custom_call.1} parent=11 // pred_check_branch
          %405 = sbr.rel (%p403) target = $region40
        $region39: #{tpu_custom_call.1} parent=11 // pred_region
          _
        $region40: #{tpu_custom_call.1} parent=11 // pred_fallthru
          _
        // Predicated region
        $region41: #{tpu_custom_call.1} parent=11 // pred_check
          %p406 = pneg %p218
        $region42: #{tpu_custom_call.1} parent=11 // pred_check_branch
          %408 = sbr.rel (%p406) target = $region44
        $region43: #{tpu_custom_call.1} parent=11 // pred_region
          _
        $region44: #{tpu_custom_call.1} parent=11 // pred_fallthru
          _
        // Predicated region
        $region45: #{tpu_custom_call.1} parent=11 // pred_check
          %p409 = pneg %p239
        $region46: #{tpu_custom_call.1} parent=11 // pred_check_branch
          %411 = sbr.rel (%p409) target = $region48
        $region47: #{tpu_custom_call.1} parent=11 // pred_region
          _
        $region48: #{tpu_custom_call.1} parent=11 // pred_fallthru
          _
        // Predicated region
        $region49: #{tpu_custom_call.1} parent=11 // pred_check
          %p412 = pneg %p260
        $region50: #{tpu_custom_call.1} parent=11 // pred_check_branch
          %414 = sbr.rel (%p412) target = $region52
        $region51: #{tpu_custom_call.1} parent=11 // pred_region
          _
        $region52: #{tpu_custom_call.1} parent=11 // pred_fallthru
          _
        // Predicated region
        $region53: #{tpu_custom_call.1} parent=11 // pred_check
          %p415 = pneg %p281
        $region54: #{tpu_custom_call.1} parent=11 // pred_check_branch
          %417 = sbr.rel (%p415) target = $region56
        $region55: #{tpu_custom_call.1} parent=11 // pred_region
          _
        $region56: #{tpu_custom_call.1} parent=11 // pred_fallthru
          _
        // Predicated region
        $region57: #{tpu_custom_call.1} parent=11 // pred_check
          %p418 = pneg %p302
        $region58: #{tpu_custom_call.1} parent=11 // pred_check_branch
          %420 = sbr.rel (%p418) target = $region60
        $region59: #{tpu_custom_call.1} parent=11 // pred_region
          _
        $region60: #{tpu_custom_call.1} parent=11 // pred_fallthru
          _
        // Predicated region
        $region61: #{tpu_custom_call.1} parent=11 // pred_check
          %p421 = pneg %p323
        $region62: #{tpu_custom_call.1} parent=11 // pred_check_branch
          %423 = sbr.rel (%p421) target = $region64
        $region63: #{tpu_custom_call.1} parent=11 // pred_region
          _
        $region64: #{tpu_custom_call.1} parent=11 // pred_fallthru
          _
        // Predicated region
        $region65: #{tpu_custom_call.1} parent=11 // pred_check
          %p424 = pneg %p344
        $region66: #{tpu_custom_call.1} parent=11 // pred_check_branch
          %426 = sbr.rel (%p424) target = $region68
        $region67: #{tpu_custom_call.1} parent=11 // pred_region
          _
        $region68: #{tpu_custom_call.1} parent=11 // pred_fallthru
          _
      $region12: #{tpu_custom_call.1} parent=5 // pred_fallthru
        _
      %p427 = scmp.lt.s32.totalorder %s24, 2
      // Predicated region
      $region69: #{tpu_custom_call.1} parent=5 // pred_check
        %p428 = pneg %p427
      $region70: #{tpu_custom_call.1} parent=5 // pred_check_branch
        %430 = sbr.rel (%p428) target = $region72
      $region71: #{tpu_custom_call.1} parent=5 // pred_region
        // Predicated region
        $region73: #{tpu_custom_call.1} parent=71 // pred_check
          %p431 = pneg %p44
        $region74: #{tpu_custom_call.1} parent=71 // pred_check_branch
          %433 = sbr.rel (%p431) target = $region76
        $region75: #{tpu_custom_call.1} parent=71 // pred_region
          %p434 = scmp.lt.s32.totalorder %s24, 1
          %s435 = scalar_select %p434, %s24, 1
          %s436 = smul.addr %s435, 4
          %s437 = scalar_lea.vmem %s0, %s436
        $region76: #{tpu_custom_call.1} parent=71 // pred_fallthru
          _
      $region72: #{tpu_custom_call.1} parent=5 // pred_fallthru
        _
      %p438 = scmp.le.s32.totalorder 1, %s24
      %p439 = scmp.lt.s32.totalorder %s24, 3
      %p440 = pnand %p438, %p439
      %p441 = pneg %p440
      // Predicated region
      $region77: #{tpu_custom_call.1} parent=5 // pred_check
        _
      $region78: #{tpu_custom_call.1} parent=5 // pred_check_branch
        %443 = sbr.rel (%p440) target = $region80
      $region79: #{tpu_custom_call.1} parent=5 // pred_region
        %s444 = ssub.s32 %s24, 1
        %p445 = scmp.lt.s32.totalorder %s29, 1
        %s446 = scalar_select %p445, %s29, 1
        %s447 = smul.addr %s446, 4
        %s448 = scalar_lea.vmem %s0, %s447
        %p449 = pneg %p50
        %p450 = pneg %p47
        %p451 = pneg %p71
        %p452 = pneg %p68
        %p453 = pneg %p92
        %p454 = pneg %p89
        %p455 = pneg %p113
        %p456 = pneg %p110
        %p457 = pneg %p134
        %p458 = pneg %p131
        %p459 = pneg %p155
        %p460 = pneg %p152
        %p461 = pneg %p176
        %p462 = pneg %p173
        %p463 = pneg %p197
        %p464 = pneg %p194
        %p465 = pneg %p218
        %p466 = pneg %p215
        %p467 = pneg %p239
        %p468 = pneg %p236
        %p469 = pneg %p260
        %p470 = pneg %p257
        %p471 = pneg %p281
        %p472 = pneg %p278
        %p473 = pneg %p302
        %p474 = pneg %p299
        %p475 = pneg %p323
        %p476 = pneg %p320
        %p477 = pneg %p344
        %p478 = pneg %p341
        %p479 = pneg %p370
        %p480 = pneg %p367
        %s481 = sand.u32 %s357, 1
        %s482 = scalar_lea.sflag [#allocation3], %s481
        %s483 = sand.u32 %s357, 1
        %s484 = smul.addr %s483, 4
        %s485 = scalar_lea.vmem [#allocation2], %s484
        %p486 = scmp.lt.s32.totalorder %s29, 1
        %s487 = scalar_select %p486, %s29, 1
        %s488 = smul.addr %s487, 4
        %s489 = scalar_lea.vmem %s0, %s488
        %v491 = vld [vmem:[%s489] sm:$0xf]
        %v492 = vunpack.c.l.bf16 %v491
        %v493 = vld [vmem:[%s1] sm:$0x1]
        %v494 = vld [vmem:[%s2] sm:$0x1]
        %vm495 = vcmask 261120
        %v496 = vsel %vm495, %v492, 0.0
        %497 = vadd.xlane.f32.xlu0 %v496
        %v498 = vpop.xlane.xlu0 %497
        %v499 = vrcp.pop 32.0
        %v500 = vmul.f32 %v498, %v499
        %v501 = vsub.f32 %v492, %v500
        %v502 = vmul.f32 %v501, %v501
        %v503 = vsel %vm495, %v502, 0.0
        %504 = vadd.xlane.f32.xlu0 %v503
        %v505 = vpop.xlane.xlu0 %504
        %v506 = vmul.f32 %v505, %v499
        %v507 = vadd.f32 %v506, 1e-05
        %v508 = vrsqrt.pop %v507
        %v509 = vmul.f32 %v501, %v508
        %v511 = vlaneseq
        %v512 = vshrl.u32 %v511, 7
        %v513 = vsub.s32 0, %v512
        %v514 = vrot.slane %v493, %v513
        %v516 = vmul.f32 %v509, %v514
        %v518 = vlaneseq
        %v519 = vshrl.u32 %v518, 7
        %v520 = vsub.s32 0, %v519
        %v521 = vrot.slane %v494, %v520
        %v523 = vadd.f32 %v516, %v521
        %v524 = vpack.c.bf16 %v523, %v523
        %v525 = vld [vmem:[%s3] sm:$0xf]
        %v526 = vld [vmem:[%s3 + $0x4] sm:$0xf]
        %v527 = vld [vmem:[%s3 + $0x8] sm:$0xf]
        %v528 = vld [vmem:[%s3 + $0xc] sm:$0xf]
        %v529 = vld [vmem:[%s3 + $0x10] sm:$0xf]
        %v530 = vld [vmem:[%s3 + $0x14] sm:$0xf]
        %v531 = vld [vmem:[%s3 + $0x18] sm:$0xf]
        %v532 = vld [vmem:[%s3 + $0x1c] sm:$0xf]
        %v533 = vld [vmem:[%s3 + $0x20] sm:$0xf]
        %v534 = vld [vmem:[%s3 + $0x24] sm:$0xf]
        %v535 = vld [vmem:[%s3 + $0x28] sm:$0xf]
        %v536 = vld [vmem:[%s3 + $0x2c] sm:$0xf]
        %v537 = vld [vmem:[%s4] sm:$0xff]
        %v538 = vld [vmem:[%s4 + $0x8] sm:$0xff]
        %v539 = vld [vmem:[%s4 + $0x10] sm:$0xff]
        %v540 = vld [vmem:[%s4 + $0x18] sm:$0xff]
        %v541 = vld [vmem:[%s4 + $0x20] sm:$0xff]
        %v542 = vld [vmem:[%s4 + $0x28] sm:$0xff]
        %v543 = vld [vmem:[%s4 + $0x30] sm:$0xff]
        %v544 = vld [vmem:[%s4 + $0x38] sm:$0xff]
        %v545 = vld [vmem:[%s4 + $0x40] sm:$0xff]
        %v546 = vld [vmem:[%s4 + $0x48] sm:$0xff]
        %v547 = vld [vmem:[%s4 + $0x50] sm:$0xff]
        %v548 = vld [vmem:[%s4 + $0x58] sm:$0xff]
        %550 = vset.pattern.permute.xlu0 0
        %551 = vperm.xlu0 %550, %v537
        %v552 = vpop.permute.xlu0 %551
        %555 = vset.pattern.permute.xlu0 0
        %556 = vperm.xlu0 %555, %v538
        %v557 = vpop.permute.xlu0 %556
        %560 = vset.pattern.permute.xlu0 0
        %561 = vperm.xlu0 %560, %v539
        %v562 = vpop.permute.xlu0 %561
        %565 = vset.pattern.permute.xlu0 0
        %566 = vperm.xlu0 %565, %v540
        %v567 = vpop.permute.xlu0 %566
        %570 = vset.pattern.permute.xlu0 0
        %571 = vperm.xlu0 %570, %v541
        %v572 = vpop.permute.xlu0 %571
        %575 = vset.pattern.permute.xlu0 0
        %576 = vperm.xlu0 %575, %v542
        %v577 = vpop.permute.xlu0 %576
        %580 = vset.pattern.permute.xlu0 0
        %581 = vperm.xlu0 %580, %v543
        %v582 = vpop.permute.xlu0 %581
        %585 = vset.pattern.permute.xlu0 0
        %586 = vperm.xlu0 %585, %v544
        %v587 = vpop.permute.xlu0 %586
        %590 = vset.pattern.permute.xlu0 0
        %591 = vperm.xlu0 %590, %v545
        %v592 = vpop.permute.xlu0 %591
        %595 = vset.pattern.permute.xlu0 0
        %596 = vperm.xlu0 %595, %v546
        %v597 = vpop.permute.xlu0 %596
        %600 = vset.pattern.permute.xlu0 0
        %601 = vperm.xlu0 %600, %v547
        %v602 = vpop.permute.xlu0 %601
        %605 = vset.pattern.permute.xlu0 0
        %606 = vperm.xlu0 %605, %v548
        %v607 = vpop.permute.xlu0 %606
        %v621 = vunpack.c.l.b16 %v525
        %v622 = vunpack.c.l.b16 %v526
        %v623 = vunpack.c.l.b16 %v527
        %v624 = vunpack.c.l.b16 %v528
        %v625 = vunpack.c.l.b16 %v529
        %v626 = vunpack.c.l.b16 %v530
        %v627 = vunpack.c.l.b16 %v531
        %v628 = vunpack.c.l.b16 %v532
        %v629 = vunpack.c.l.b16 %v533
        %v630 = vunpack.c.l.b16 %v534
        %v631 = vunpack.c.l.b16 %v535
        %v632 = vunpack.c.l.b16 %v536
        %v633 = vpack.c.b16 %v622, %v621
        %v634 = vpack.c.b16 %v624, %v623
        %v635 = vpack.c.b16 %v626, %v625
        %v636 = vpack.c.b16 %v628, %v627
        %v637 = vpack.c.b16 %v630, %v629
        %v638 = vpack.c.b16 %v632, %v631
        %v640 = vsel %vm495, %v633, 0
        %v643 = vsel %vm495, %v634, 0
        %v646 = vsel %vm495, %v635, 0
        %v649 = vsel %vm495, %v636, 0
        %v652 = vsel %vm495, %v637, 0
        %v655 = vsel %vm495, %v638, 0
        %v658 = vsel %vm495, %v524, 0
        %660 = vmatprep.subr.bf16.mxu0 0
        %661 = vmatpush1.bf16.xpose.msra.mxu0 %v658
        %662 = vmatprep.subr.bf16.mxu0 0
        %663 = vmatpush1.bf16.xpose.msra.mxu0 0
        %664 = vmatprep.subr.bf16.mxu0 0
        %665 = vmatpush1.bf16.xpose.msra.mxu0 0
        %666 = vmatprep.subr.bf16.mxu0 0
        %667 = vmatpush1.bf16.xpose.msra.mxu0 0
        %668 = vmatprep.subr.bf16.mxu0 0
        %669 = vmatpush1.bf16.xpose.msra.mxu0 0
        %670 = vmatprep.subr.bf16.mxu0 0
        %671 = vmatpush1.bf16.xpose.msra.mxu0 0
        %672 = vmatprep.subr.bf16.mxu0 0
        %673 = vmatpush1.bf16.xpose.msra.mxu0 0
        %674 = vmatprep.subr.bf16.mxu0 0
        %675 = vmatpush1.bf16.xpose.msra.mxu0 0
        %676 = vmatprep.subr.bf16.mxu0 0
        %677 = vmatpush1.bf16.xpose.msra.mxu0 0
        %678 = vmatprep.subr.bf16.mxu0 0
        %679 = vmatpush1.bf16.xpose.msra.mxu0 0
        %680 = vmatprep.subr.bf16.mxu0 0
        %681 = vmatpush1.bf16.xpose.msra.mxu0 0
        %682 = vmatprep.subr.bf16.mxu0 0
        %683 = vmatpush1.bf16.xpose.msra.mxu0 0
        %684 = vmatprep.subr.bf16.mxu0 0
        %685 = vmatpush1.bf16.xpose.msra.mxu0 0
        %686 = vmatprep.subr.bf16.mxu0 0
        %687 = vmatpush1.bf16.xpose.msra.mxu0 0
        %688 = vmatprep.subr.bf16.mxu0 0
        %689 = vmatpush1.bf16.xpose.msra.mxu0 0
        %690 = vmatprep.subr.bf16.mxu0 0
        %691 = vmatpush1.bf16.xpose.msra.mxu0 0
        %692 = vmatprep.mubr.bf16.mxu0 0
        %693 = vmatmul.mubr.bf16.gmra.mrb[0].mxu0 %v640
        %v694 = vpop.f32.mrb[0].mxu0
        %v695 = vadd.f32 %v552, %v694
        %v696 = vpop.f32.mrb[0].mxu0
        %v697 = vpop.f32.mrb[0].mxu0
        %v698 = vadd.f32 %v557, %v697
        %v699 = vpop.f32.mrb[0].mxu0
        %700 = vmatprep.mubr.bf16.mxu0 0
        %701 = vmatmul.mubr.bf16.gmra.mrb[0].mxu0 %v643
        %v702 = vpop.f32.mrb[0].mxu0
        %v703 = vadd.f32 %v562, %v702
        %v704 = vpop.f32.mrb[0].mxu0
        %v705 = vpop.f32.mrb[0].mxu0
        %v706 = vadd.f32 %v567, %v705
        %v707 = vpop.f32.mrb[0].mxu0
        %708 = vmatprep.mubr.bf16.mxu0 0
        %709 = vmatmul.mubr.bf16.gmra.mrb[0].mxu0 %v646
        %v710 = vpop.f32.mrb[0].mxu0
        %v711 = vadd.f32 %v572, %v710
        %v712 = vpop.f32.mrb[0].mxu0
        %v713 = vpop.f32.mrb[0].mxu0
        %v714 = vadd.f32 %v577, %v713
        %v715 = vpop.f32.mrb[0].mxu0
        %716 = vmatprep.mubr.bf16.mxu0 0
        %717 = vmatmul.mubr.bf16.gmra.mrb[0].mxu0 %v649
        %v718 = vpop.f32.mrb[0].mxu0
        %v719 = vadd.f32 %v582, %v718
        %v720 = vpop.f32.mrb[0].mxu0
        %v721 = vpop.f32.mrb[0].mxu0
        %v722 = vadd.f32 %v587, %v721
        %v723 = vpop.f32.mrb[0].mxu0
        %724 = vmatprep.mubr.bf16.mxu0 0
        %725 = vmatmul.mubr.bf16.gmra.mrb[0].mxu0 %v652
        %v726 = vpop.f32.mrb[0].mxu0
        %v727 = vadd.f32 %v592, %v726
        %v728 = vpop.f32.mrb[0].mxu0
        %v729 = vpop.f32.mrb[0].mxu0
        %v730 = vadd.f32 %v597, %v729
        %v731 = vpop.f32.mrb[0].mxu0
        %732 = vmatprep.mubr.bf16.mxu0 0
        %733 = vmatmul.mubr.bf16.gmra.mrb[0].mxu0 %v655
        %v734 = vpop.f32.mrb[0].mxu0
        %v735 = vadd.f32 %v602, %v734
        %v736 = vpop.f32.mrb[0].mxu0
        %v737 = vpop.f32.mrb[0].mxu0
        %v738 = vadd.f32 %v607, %v737
        %v739 = vpop.f32.mrb[0].mxu0
        %740 = vdwg.mxu0
        %v741 = vmul.f32 %v695, 0.35355338
        %v742 = vmul.f32 %v698, 0.35355338
        %v743 = vmul.f32 %v703, 0.35355338
        %v744 = vmul.f32 %v706, 0.35355338
        %v745 = vpack.c.bf16 %v711, %v711
        %v746 = vpack.c.bf16 %v714, %v714
        %v747 = vpack.c.bf16 %v719, %v719
        %v748 = vpack.c.bf16 %v722, %v722
        %v749 = vpack.c.bf16 %v727, %v727
        %v750 = vpack.c.bf16 %v730, %v730
        %v751 = vpack.c.bf16 %v735, %v735
        %v752 = vpack.c.bf16 %v738, %v738
        %753 = vxpose.xlu0.b32.start [1/16] %v741, 128
        %754 = vxpose.xlu0.b32.cont [2/16] 0.0, 128
        %755 = vxpose.xlu0.b32.cont [3/16] 0.0, 128
        %756 = vxpose.xlu0.b32.cont [4/16] 0.0, 128
        %757 = vxpose.xlu0.b32.cont [5/16] 0.0, 128
        %758 = vxpose.xlu0.b32.cont [6/16] 0.0, 128
        %759 = vxpose.xlu0.b32.cont [7/16] 0.0, 128
        %760 = vxpose.xlu0.b32.cont [8/16] 0.0, 128
        %761 = vxpose.xlu0.b32.cont [9/16] 0.0, 128
        %762 = vxpose.xlu0.b32.cont [10/16] 0.0, 128
        %763 = vxpose.xlu0.b32.cont [11/16] 0.0, 128
        %764 = vxpose.xlu0.b32.cont [12/16] 0.0, 128
        %765 = vxpose.xlu0.b32.cont [13/16] 0.0, 128
        %766 = vxpose.xlu0.b32.cont [14/16] 0.0, 128
        %767 = vxpose.xlu0.b32.cont [15/16] 0.0, 128
        %768 = vxpose.xlu0.b32.end [16/16] 0.0, 128
        %v769 = vpop.trf.xlu0
        %v770 = vpop.trf.xlu0
        %v771 = vpop.trf.xlu0
        %v772 = vpop.trf.xlu0
        %v773 = vpop.trf.xlu0
        %v774 = vpop.trf.xlu0
        %v775 = vpop.trf.xlu0
        %v776 = vpop.trf.xlu0
        %v777 = vpop.trf.xlu0
        %v778 = vpop.trf.xlu0
        %v779 = vpop.trf.xlu0
        %v780 = vpop.trf.xlu0
        %v781 = vpop.trf.xlu0
        %v782 = vpop.trf.xlu0
        %v783 = vpop.trf.xlu0
        %v784 = vpop.trf.xlu0
        %785 = vxpose.xlu0.b32.start [1/16] %v742, 128
        %786 = vxpose.xlu0.b32.cont [2/16] 0.0, 128
        %787 = vxpose.xlu0.b32.cont [3/16] 0.0, 128
        %788 = vxpose.xlu0.b32.cont [4/16] 0.0, 128
        %789 = vxpose.xlu0.b32.cont [5/16] 0.0, 128
        %790 = vxpose.xlu0.b32.cont [6/16] 0.0, 128
        %791 = vxpose.xlu0.b32.cont [7/16] 0.0, 128
        %792 = vxpose.xlu0.b32.cont [8/16] 0.0, 128
        %793 = vxpose.xlu0.b32.cont [9/16] 0.0, 128
        %794 = vxpose.xlu0.b32.cont [10/16] 0.0, 128
        %795 = vxpose.xlu0.b32.cont [11/16] 0.0, 128
        %796 = vxpose.xlu0.b32.cont [12/16] 0.0, 128
        %797 = vxpose.xlu0.b32.cont [13/16] 0.0, 128
        %798 = vxpose.xlu0.b32.cont [14/16] 0.0, 128
        %799 = vxpose.xlu0.b32.cont [15/16] 0.0, 128
        %800 = vxpose.xlu0.b32.end [16/16] 0.0, 128
        %v801 = vpop.trf.xlu0
        %v802 = vpop.trf.xlu0
        %v803 = vpop.trf.xlu0
        %v804 = vpop.trf.xlu0
        %v805 = vpop.trf.xlu0
        %v806 = vpop.trf.xlu0
        %v807 = vpop.trf.xlu0
        %v808 = vpop.trf.xlu0
        %v809 = vpop.trf.xlu0
        %v810 = vpop.trf.xlu0
        %v811 = vpop.trf.xlu0
        %v812 = vpop.trf.xlu0
        %v813 = vpop.trf.xlu0
        %v814 = vpop.trf.xlu0
        %v815 = vpop.trf.xlu0
        %v816 = vpop.trf.xlu0
        %817 = vxpose.xlu0.b32.start [1/16] %v743, 128
        %818 = vxpose.xlu0.b32.cont [2/16] 0.0, 128
        %819 = vxpose.xlu0.b32.cont [3/16] 0.0, 128
        %820 = vxpose.xlu0.b32.cont [4/16] 0.0, 128
        %821 = vxpose.xlu0.b32.cont [5/16] 0.0, 128
        %822 = vxpose.xlu0.b32.cont [6/16] 0.0, 128
        %823 = vxpose.xlu0.b32.cont [7/16] 0.0, 128
        %824 = vxpose.xlu0.b32.cont [8/16] 0.0, 128
        %825 = vxpose.xlu0.b32.cont [9/16] 0.0, 128
        %826 = vxpose.xlu0.b32.cont [10/16] 0.0, 128
        %827 = vxpose.xlu0.b32.cont [11/16] 0.0, 128
        %828 = vxpose.xlu0.b32.cont [12/16] 0.0, 128
        %829 = vxpose.xlu0.b32.cont [13/16] 0.0, 128
        %830 = vxpose.xlu0.b32.cont [14/16] 0.0, 128
        %831 = vxpose.xlu0.b32.cont [15/16] 0.0, 128
        %832 = vxpose.xlu0.b32.end [16/16] 0.0, 128
        %v833 = vpop.trf.xlu0
        %v834 = vpop.trf.xlu0
        %v835 = vpop.trf.xlu0
        %v836 = vpop.trf.xlu0
        %v837 = vpop.trf.xlu0
        %v838 = vpop.trf.xlu0
        %v839 = vpop.trf.xlu0
        %v840 = vpop.trf.xlu0
        %v841 = vpop.trf.xlu0
        %v842 = vpop.trf.xlu0
        %v843 = vpop.trf.xlu0
        %v844 = vpop.trf.xlu0
        %v845 = vpop.trf.xlu0
        %v846 = vpop.trf.xlu0
        %v847 = vpop.trf.xlu0
        %v848 = vpop.trf.xlu0
        %849 = vxpose.xlu0.b32.start [1/16] %v744, 128
        %850 = vxpose.xlu0.b32.cont [2/16] 0.0, 128
        %851 = vxpose.xlu0.b32.cont [3/16] 0.0, 128
        %852 = vxpose.xlu0.b32.cont [4/16] 0.0, 128
        %853 = vxpose.xlu0.b32.cont [5/16] 0.0, 128
        %854 = vxpose.xlu0.b32.cont [6/16] 0.0, 128
        %855 = vxpose.xlu0.b32.cont [7/16] 0.0, 128
        %856 = vxpose.xlu0.b32.cont [8/16] 0.0, 128
        %857 = vxpose.xlu0.b32.cont [9/16] 0.0, 128
        %858 = vxpose.xlu0.b32.cont [10/16] 0.0, 128
        %859 = vxpose.xlu0.b32.cont [11/16] 0.0, 128
        %860 = vxpose.xlu0.b32.cont [12/16] 0.0, 128
        %861 = vxpose.xlu0.b32.cont [13/16] 0.0, 128
        %862 = vxpose.xlu0.b32.cont [14/16] 0.0, 128
        %863 = vxpose.xlu0.b32.cont [15/16] 0.0, 128
        %864 = vxpose.xlu0.b32.end [16/16] 0.0, 128
        %v865 = vpop.trf.xlu0
        %v866 = vpop.trf.xlu0
        %v867 = vpop.trf.xlu0
        %v868 = vpop.trf.xlu0
        %v869 = vpop.trf.xlu0
        %v870 = vpop.trf.xlu0
        %v871 = vpop.trf.xlu0
        %v872 = vpop.trf.xlu0
        %v873 = vpop.trf.xlu0
        %v874 = vpop.trf.xlu0
        %v875 = vpop.trf.xlu0
        %v876 = vpop.trf.xlu0
        %v877 = vpop.trf.xlu0
        %v878 = vpop.trf.xlu0
        %v879 = vpop.trf.xlu0
        %v880 = vpop.trf.xlu0
        %v881 = vpack.c.bf16 %v769, %v769
        %v882 = vpack.c.bf16 %v801, %v801
        %v883 = vpack.c.bf16 %v833, %v833
        %v884 = vpack.c.bf16 %v865, %v865
        %vm885 = vcmask 64512
        %v887 = vsel %vm885, %v881, 0
        %vm889 = vcmask 1043456
        %v891 = vsel %vm889, %v745, 0
        %893 = vmatprep.subr.bf16.mxu0 0
        %894 = vmatpush1.bf16.msra.mxu0 %v891
        %895 = vmatprep.subr.bf16.mxu0 0
        %896 = vmatpush1.bf16.msra.mxu0 0
        %897 = vmatprep.subr.bf16.mxu0 0
        %898 = vmatpush1.bf16.msra.mxu0 0
        %899 = vmatprep.subr.bf16.mxu0 0
        %900 = vmatpush1.bf16.msra.mxu0 0
        %901 = vmatprep.subr.bf16.mxu0 0
        %902 = vmatpush1.bf16.msra.mxu0 0
        %903 = vmatprep.subr.bf16.mxu0 0
        %904 = vmatpush1.bf16.msra.mxu0 0
        %905 = vmatprep.subr.bf16.mxu0 0
        %906 = vmatpush1.bf16.msra.mxu0 0
        %907 = vmatprep.subr.bf16.mxu0 0
        %908 = vmatpush1.bf16.msra.mxu0 0
        %909 = vmatprep.subr.bf16.mxu0 0
        %910 = vmatpush1.bf16.msra.mxu0 0
        %911 = vmatprep.subr.bf16.mxu0 0
        %912 = vmatpush1.bf16.msra.mxu0 0
        %913 = vmatprep.subr.bf16.mxu0 0
        %914 = vmatpush1.bf16.msra.mxu0 0
        %915 = vmatprep.subr.bf16.mxu0 0
        %916 = vmatpush1.bf16.msra.mxu0 0
        %917 = vmatprep.subr.bf16.mxu0 0
        %918 = vmatpush1.bf16.msra.mxu0 0
        %919 = vmatprep.subr.bf16.mxu0 0
        %920 = vmatpush1.bf16.msra.mxu0 0
        %921 = vmatprep.subr.bf16.mxu0 0
        %922 = vmatpush1.bf16.msra.mxu0 0
        %923 = vmatprep.subr.bf16.mxu0 0
        %924 = vmatpush1.bf16.msra.mxu0 0
        %925 = vmatprep.mubr.bf16.mxu0 0
        %926 = vmatmul.mubr.bf16.gmra.mrb[0].mxu0 %v887
        %v927 = vpop.f32.mrb[0].mxu0
        %v928 = vadd.f32 0.0, %v927
        %v929 = vpop.f32.mrb[0].mxu0
        %v930 = vpop.f32.mrb[0].mxu0
        %v931 = vpop.f32.mrb[0].mxu0
        %932 = vdwg.mxu0
        %v934 = vsel %vm885, %v882, 0
        %v937 = vsel %vm889, %v746, 0
        %939 = vmatprep.subr.bf16.mxu0 0
        %940 = vmatpush1.bf16.msra.mxu0 %v937
        %941 = vmatprep.subr.bf16.mxu0 0
        %942 = vmatpush1.bf16.msra.mxu0 0
        %943 = vmatprep.subr.bf16.mxu0 0
        %944 = vmatpush1.bf16.msra.mxu0 0
        %945 = vmatprep.subr.bf16.mxu0 0
        %946 = vmatpush1.bf16.msra.mxu0 0
        %947 = vmatprep.subr.bf16.mxu0 0
        %948 = vmatpush1.bf16.msra.mxu0 0
        %949 = vmatprep.subr.bf16.mxu0 0
        %950 = vmatpush1.bf16.msra.mxu0 0
        %951 = vmatprep.subr.bf16.mxu0 0
        %952 = vmatpush1.bf16.msra.mxu0 0
        %953 = vmatprep.subr.bf16.mxu0 0
        %954 = vmatpush1.bf16.msra.mxu0 0
        %955 = vmatprep.subr.bf16.mxu0 0
        %956 = vmatpush1.bf16.msra.mxu0 0
        %957 = vmatprep.subr.bf16.mxu0 0
        %958 = vmatpush1.bf16.msra.mxu0 0
        %959 = vmatprep.subr.bf16.mxu0 0
        %960 = vmatpush1.bf16.msra.mxu0 0
        %961 = vmatprep.subr.bf16.mxu0 0
        %962 = vmatpush1.bf16.msra.mxu0 0
        %963 = vmatprep.subr.bf16.mxu0 0
        %964 = vmatpush1.bf16.msra.mxu0 0
        %965 = vmatprep.subr.bf16.mxu0 0
        %966 = vmatpush1.bf16.msra.mxu0 0
        %967 = vmatprep.subr.bf16.mxu0 0
        %968 = vmatpush1.bf16.msra.mxu0 0
        %969 = vmatprep.subr.bf16.mxu0 0
        %970 = vmatpush1.bf16.msra.mxu0 0
        %971 = vmatprep.mubr.bf16.mxu0 0
        %972 = vmatmul.mubr.bf16.gmra.mrb[0].mxu0 %v934
        %v973 = vpop.f32.mrb[0].mxu0
        %v974 = vadd.f32 0.0, %v973
        %v975 = vpop.f32.mrb[0].mxu0
        %v976 = vpop.f32.mrb[0].mxu0
        %v977 = vpop.f32.mrb[0].mxu0
        %978 = vdwg.mxu0
        %v980 = vsel %vm885, %v883, 0
        %v983 = vsel %vm889, %v747, 0
        %985 = vmatprep.subr.bf16.mxu0 0
        %986 = vmatpush1.bf16.msra.mxu0 %v983
        %987 = vmatprep.subr.bf16.mxu0 0
        %988 = vmatpush1.bf16.msra.mxu0 0
        %989 = vmatprep.subr.bf16.mxu0 0
        %990 = vmatpush1.bf16.msra.mxu0 0
        %991 = vmatprep.subr.bf16.mxu0 0
        %992 = vmatpush1.bf16.msra.mxu0 0
        %993 = vmatprep.subr.bf16.mxu0 0
        %994 = vmatpush1.bf16.msra.mxu0 0
        %995 = vmatprep.subr.bf16.mxu0 0
        %996 = vmatpush1.bf16.msra.mxu0 0
        %997 = vmatprep.subr.bf16.mxu0 0
        %998 = vmatpush1.bf16.msra.mxu0 0
        %999 = vmatprep.subr.bf16.mxu0 0
        %1000 = vmatpush1.bf16.msra.mxu0 0
        %1001 = vmatprep.subr.bf16.mxu0 0
        %1002 = vmatpush1.bf16.msra.mxu0 0
        %1003 = vmatprep.subr.bf16.mxu0 0
        %1004 = vmatpush1.bf16.msra.mxu0 0
        %1005 = vmatprep.subr.bf16.mxu0 0
        %1006 = vmatpush1.bf16.msra.mxu0 0
        %1007 = vmatprep.subr.bf16.mxu0 0
        %1008 = vmatpush1.bf16.msra.mxu0 0
        %1009 = vmatprep.subr.bf16.mxu0 0
        %1010 = vmatpush1.bf16.msra.mxu0 0
        %1011 = vmatprep.subr.bf16.mxu0 0
        %1012 = vmatpush1.bf16.msra.mxu0 0
        %1013 = vmatprep.subr.bf16.mxu0 0
        %1014 = vmatpush1.bf16.msra.mxu0 0
        %1015 = vmatprep.subr.bf16.mxu0 0
        %1016 = vmatpush1.bf16.msra.mxu0 0
        %1017 = vmatprep.mubr.bf16.mxu0 0
        %1018 = vmatmul.mubr.bf16.gmra.mrb[0].mxu0 %v980
        %v1019 = vpop.f32.mrb[0].mxu0
        %v1020 = vadd.f32 0.0, %v1019
        %v1021 = vpop.f32.mrb[0].mxu0
        %v1022 = vpop.f32.mrb[0].mxu0
        %v1023 = vpop.f32.mrb[0].mxu0
        %1024 = vdwg.mxu0
        %v1026 = vsel %vm885, %v884, 0
        %v1029 = vsel %vm889, %v748, 0
        %1031 = vmatprep.subr.bf16.mxu0 0
        %1032 = vmatpush1.bf16.msra.mxu0 %v1029
        %1033 = vmatprep.subr.bf16.mxu0 0
        %1034 = vmatpush1.bf16.msra.mxu0 0
        %1035 = vmatprep.subr.bf16.mxu0 0
        %1036 = vmatpush1.bf16.msra.mxu0 0
        %1037 = vmatprep.subr.bf16.mxu0 0
        %1038 = vmatpush1.bf16.msra.mxu0 0
        %1039 = vmatprep.subr.bf16.mxu0 0
        %1040 = vmatpush1.bf16.msra.mxu0 0
        %1041 = vmatprep.subr.bf16.mxu0 0
        %1042 = vmatpush1.bf16.msra.mxu0 0
        %1043 = vmatprep.subr.bf16.mxu0 0
        %1044 = vmatpush1.bf16.msra.mxu0 0
        %1045 = vmatprep.subr.bf16.mxu0 0
        %1046 = vmatpush1.bf16.msra.mxu0 0
        %1047 = vmatprep.subr.bf16.mxu0 0
        %1048 = vmatpush1.bf16.msra.mxu0 0
        %1049 = vmatprep.subr.bf16.mxu0 0
        %1050 = vmatpush1.bf16.msra.mxu0 0
        %1051 = vmatprep.subr.bf16.mxu0 0
        %1052 = vmatpush1.bf16.msra.mxu0 0
        %1053 = vmatprep.subr.bf16.mxu0 0
        %1054 = vmatpush1.bf16.msra.mxu0 0
        %1055 = vmatprep.subr.bf16.mxu0 0
        %1056 = vmatpush1.bf16.msra.mxu0 0
        %1057 = vmatprep.subr.bf16.mxu0 0
        %1058 = vmatpush1.bf16.msra.mxu0 0
        %1059 = vmatprep.subr.bf16.mxu0 0
        %1060 = vmatpush1.bf16.msra.mxu0 0
        %1061 = vmatprep.subr.bf16.mxu0 0
        %1062 = vmatpush1.bf16.msra.mxu0 0
        %1063 = vmatprep.mubr.bf16.mxu0 0
        %1064 = vmatmul.mubr.bf16.gmra.mrb[0].mxu0 %v1026
        %v1065 = vpop.f32.mrb[0].mxu0
        %v1066 = vadd.f32 0.0, %v1065
        %v1067 = vpop.f32.mrb[0].mxu0
        %v1068 = vpop.f32.mrb[0].mxu0
        %v1069 = vpop.f32.mrb[0].mxu0
        %1070 = vdwg.mxu0
        %v1071 = vlaneseq
        %v1072 = vshrl.u32 %v1071, 7
        %v1073 = vlaneseq
        %v1074 = vand.u32 %v1073, 127
        %vm1075 = vcmp.gt.s32.totalorder %v1074, %v1072
        %v1076 = vsel %vm1075, 1, 0
        %vm1077 = vcmp.eq.s32.totalorder %v1076, 1
        %v1078 = vsel %vm1077, -1e+30, %v928
        %v1079 = vsel %vm1077, -1e+30, %v974
        %v1080 = vsel %vm1077, -1e+30, %v1020
        %v1081 = vsel %vm1077, -1e+30, %v1066
        %v1082 = vsel %vm885, %v1078, -inf
        %1083 = vmax.xlane.f32.xlu0 %v1082
        %v1084 = vpop.xlane.xlu0 %1083
        %v1085 = vsel %vm885, %v1079, -inf
        %1086 = vmax.xlane.f32.xlu0 %v1085
        %v1087 = vpop.xlane.xlu0 %1086
        %v1088 = vsel %vm885, %v1080, -inf
        %1089 = vmax.xlane.f32.xlu0 %v1088
        %v1090 = vpop.xlane.xlu0 %1089
        %v1091 = vsel %vm885, %v1081, -inf
        %1092 = vmax.xlane.f32.xlu0 %v1091
        %v1093 = vpop.xlane.xlu0 %1092
        %v1094 = vsub.f32 %v1078, %v1084
        %v1095 = vsub.f32 %v1079, %v1087
        %v1096 = vsub.f32 %v1080, %v1090
        %v1097 = vsub.f32 %v1081, %v1093
        %v1098 = vmul.f32 %v1094, 1.442695
        %v1099 = vpow.pop %v1098
        %v1100 = vmul.f32 %v1095, 1.442695
        %v1101 = vpow.pop %v1100
        %v1102 = vmul.f32 %v1096, 1.442695
        %v1103 = vpow.pop %v1102
        %v1104 = vmul.f32 %v1097, 1.442695
        %v1105 = vpow.pop %v1104
        %v1106 = vsel %vm885, %v1099, 0.0
        %1107 = vadd.xlane.f32.xlu0 %v1106
        %v1108 = vpop.xlane.xlu0 %1107
        %v1109 = vsel %vm885, %v1101, 0.0
        %1110 = vadd.xlane.f32.xlu0 %v1109
        %v1111 = vpop.xlane.xlu0 %1110
        %v1112 = vsel %vm885, %v1103, 0.0
        %1113 = vadd.xlane.f32.xlu0 %v1112
        %v1114 = vpop.xlane.xlu0 %1113
        %v1115 = vsel %vm885, %v1105, 0.0
        %1116 = vadd.xlane.f32.xlu0 %v1115
        %v1117 = vpop.xlane.xlu0 %1116
        %v1118 = vrcp.pop %v1108
        %v1119 = vrcp.pop %v1111
        %v1120 = vrcp.pop %v1114
        %v1121 = vrcp.pop %v1117
        %v1122 = vmul.f32 %v1099, %v1118
        %v1123 = vmul.f32 %v1101, %v1119
        %v1124 = vmul.f32 %v1103, %v1120
        %v1125 = vmul.f32 %v1105, %v1121
        %v1126 = vpack.c.bf16 %v1122, %v1122
        %v1127 = vpack.c.bf16 %v1123, %v1123
        %v1128 = vpack.c.bf16 %v1124, %v1124
        %v1129 = vpack.c.bf16 %v1125, %v1125
        %v1131 = vsel %vm885, %v749, 0
        %v1134 = vsel %vm885, %v1126, 0
        %1136 = vmatprep.subr.bf16.mxu0 0
        %1137 = vmatpush1.bf16.xpose.msra.mxu0 %v1134
        %1138 = vmatprep.subr.bf16.mxu0 0
        %1139 = vmatpush1.bf16.xpose.msra.mxu0 0
        %1140 = vmatprep.subr.bf16.mxu0 0
        %1141 = vmatpush1.bf16.xpose.msra.mxu0 0
        %1142 = vmatprep.subr.bf16.mxu0 0
        %1143 = vmatpush1.bf16.xpose.msra.mxu0 0
        %1144 = vmatprep.subr.bf16.mxu0 0
        %1145 = vmatpush1.bf16.xpose.msra.mxu0 0
        %1146 = vmatprep.subr.bf16.mxu0 0
        %1147 = vmatpush1.bf16.xpose.msra.mxu0 0
        %1148 = vmatprep.subr.bf16.mxu0 0
        %1149 = vmatpush1.bf16.xpose.msra.mxu0 0
        %1150 = vmatprep.subr.bf16.mxu0 0
        %1151 = vmatpush1.bf16.xpose.msra.mxu0 0
        %1152 = vmatprep.subr.bf16.mxu0 0
        %1153 = vmatpush1.bf16.xpose.msra.mxu0 0
        %1154 = vmatprep.subr.bf16.mxu0 0
        %1155 = vmatpush1.bf16.xpose.msra.mxu0 0
        %1156 = vmatprep.subr.bf16.mxu0 0
        %1157 = vmatpush1.bf16.xpose.msra.mxu0 0
        %1158 = vmatprep.subr.bf16.mxu0 0
        %1159 = vmatpush1.bf16.xpose.msra.mxu0 0
        %1160 = vmatprep.subr.bf16.mxu0 0
        %1161 = vmatpush1.bf16.xpose.msra.mxu0 0
        %1162 = vmatprep.subr.bf16.mxu0 0
        %1163 = vmatpush1.bf16.xpose.msra.mxu0 0
        %1164 = vmatprep.subr.bf16.mxu0 0
        %1165 = vmatpush1.bf16.xpose.msra.mxu0 0
        %1166 = vmatprep.subr.bf16.mxu0 0
        %1167 = vmatpush1.bf16.xpose.msra.mxu0 0
        %1168 = vmatprep.mubr.bf16.mxu0 0
        %1169 = vmatmul.mubr.bf16.gmra.mrb[0].mxu0 %v1131
        %v1170 = vpop.f32.mrb[0].mxu0
        %v1171 = vadd.f32 0.0, %v1170
        %v1172 = vpop.f32.mrb[0].mxu0
        %v1173 = vpop.f32.mrb[0].mxu0
        %v1174 = vpop.f32.mrb[0].mxu0
        %1175 = vdwg.mxu0
        %v1177 = vsel %vm885, %v750, 0
        %v1180 = vsel %vm885, %v1127, 0
        %1182 = vmatprep.subr.bf16.mxu0 0
        %1183 = vmatpush1.bf16.xpose.msra.mxu0 %v1180
        %1184 = vmatprep.subr.bf16.mxu0 0
        %1185 = vmatpush1.bf16.xpose.msra.mxu0 0
        %1186 = vmatprep.subr.bf16.mxu0 0
        %1187 = vmatpush1.bf16.xpose.msra.mxu0 0
        %1188 = vmatprep.subr.bf16.mxu0 0
        %1189 = vmatpush1.bf16.xpose.msra.mxu0 0
        %1190 = vmatprep.subr.bf16.mxu0 0
        %1191 = vmatpush1.bf16.xpose.msra.mxu0 0
        %1192 = vmatprep.subr.bf16.mxu0 0
        %1193 = vmatpush1.bf16.xpose.msra.mxu0 0
        %1194 = vmatprep.subr.bf16.mxu0 0
        %1195 = vmatpush1.bf16.xpose.msra.mxu0 0
        %1196 = vmatprep.subr.bf16.mxu0 0
        %1197 = vmatpush1.bf16.xpose.msra.mxu0 0
        %1198 = vmatprep.subr.bf16.mxu0 0
        %1199 = vmatpush1.bf16.xpose.msra.mxu0 0
        %1200 = vmatprep.subr.bf16.mxu0 0
        %1201 = vmatpush1.bf16.xpose.msra.mxu0 0
        %1202 = vmatprep.subr.bf16.mxu0 0
        %1203 = vmatpush1.bf16.xpose.msra.mxu0 0
        %1204 = vmatprep.subr.bf16.mxu0 0
        %1205 = vmatpush1.bf16.xpose.msra.mxu0 0
        %1206 = vmatprep.subr.bf16.mxu0 0
        %1207 = vmatpush1.bf16.xpose.msra.mxu0 0
        %1208 = vmatprep.subr.bf16.mxu0 0
        %1209 = vmatpush1.bf16.xpose.msra.mxu0 0
        %1210 = vmatprep.subr.bf16.mxu0 0
        %1211 = vmatpush1.bf16.xpose.msra.mxu0 0
        %1212 = vmatprep.subr.bf16.mxu0 0
        %1213 = vmatpush1.bf16.xpose.msra.mxu0 0
        %1214 = vmatprep.mubr.bf16.mxu0 0
        %1215 = vmatmul.mubr.bf16.gmra.mrb[0].mxu0 %v1177
        %v1216 = vpop.f32.mrb[0].mxu0
        %v1217 = vadd.f32 0.0, %v1216
        %v1218 = vpop.f32.mrb[0].mxu0
        %v1219 = vpop.f32.mrb[0].mxu0
        %v1220 = vpop.f32.mrb[0].mxu0
        %1221 = vdwg.mxu0
        %v1223 = vsel %vm885, %v751, 0
        %v1226 = vsel %vm885, %v1128, 0
        %1228 = vmatprep.subr.bf16.mxu0 0
        %1229 = vmatpush1.bf16.xpose.msra.mxu0 %v1226
        %1230 = vmatprep.subr.bf16.mxu0 0
        %1231 = vmatpush1.bf16.xpose.msra.mxu0 0
        %1232 = vmatprep.subr.bf16.mxu0 0
        %1233 = vmatpush1.bf16.xpose.msra.mxu0 0
        %1234 = vmatprep.subr.bf16.mxu0 0
        %1235 = vmatpush1.bf16.xpose.msra.mxu0 0
        %1236 = vmatprep.subr.bf16.mxu0 0
        %1237 = vmatpush1.bf16.xpose.msra.mxu0 0
        %1238 = vmatprep.subr.bf16.mxu0 0
        %1239 = vmatpush1.bf16.xpose.msra.mxu0 0
        %1240 = vmatprep.subr.bf16.mxu0 0
        %1241 = vmatpush1.bf16.xpose.msra.mxu0 0
        %1242 = vmatprep.subr.bf16.mxu0 0
        %1243 = vmatpush1.bf16.xpose.msra.mxu0 0
        %1244 = vmatprep.subr.bf16.mxu0 0
        %1245 = vmatpush1.bf16.xpose.msra.mxu0 0
        %1246 = vmatprep.subr.bf16.mxu0 0
        %1247 = vmatpush1.bf16.xpose.msra.mxu0 0
        %1248 = vmatprep.subr.bf16.mxu0 0
        %1249 = vmatpush1.bf16.xpose.msra.mxu0 0
        %1250 = vmatprep.subr.bf16.mxu0 0
        %1251 = vmatpush1.bf16.xpose.msra.mxu0 0
        %1252 = vmatprep.subr.bf16.mxu0 0
        %1253 = vmatpush1.bf16.xpose.msra.mxu0 0
        %1254 = vmatprep.subr.bf16.mxu0 0
        %1255 = vmatpush1.bf16.xpose.msra.mxu0 0
        %1256 = vmatprep.subr.bf16.mxu0 0
        %1257 = vmatpush1.bf16.xpose.msra.mxu0 0
        %1258 = vmatprep.subr.bf16.mxu0 0
        %1259 = vmatpush1.bf16.xpose.msra.mxu0 0
        %1260 = vmatprep.mubr.bf16.mxu0 0
        %1261 = vmatmul.mubr.bf16.gmra.mrb[0].mxu0 %v1223
        %v1262 = vpop.f32.mrb[0].mxu0
        %v1263 = vadd.f32 0.0, %v1262
        %v1264 = vpop.f32.mrb[0].mxu0
        %v1265 = vpop.f32.mrb[0].mxu0
        %v1266 = vpop.f32.mrb[0].mxu0
        %1267 = vdwg.mxu0
        %v1269 = vsel %vm885, %v752, 0
        %v1272 = vsel %vm885, %v1129, 0
        %1274 = vmatprep.subr.bf16.mxu0 0
        %1275 = vmatpush1.bf16.xpose.msra.mxu0 %v1272
        %1276 = vmatprep.subr.bf16.mxu0 0
        %1277 = vmatpush1.bf16.xpose.msra.mxu0 0
        %1278 = vmatprep.subr.bf16.mxu0 0
        %1279 = vmatpush1.bf16.xpose.msra.mxu0 0
        %1280 = vmatprep.subr.bf16.mxu0 0
        %1281 = vmatpush1.bf16.xpose.msra.mxu0 0
        %1282 = vmatprep.subr.bf16.mxu0 0
        %1283 = vmatpush1.bf16.xpose.msra.mxu0 0
        %1284 = vmatprep.subr.bf16.mxu0 0
        %1285 = vmatpush1.bf16.xpose.msra.mxu0 0
        %1286 = vmatprep.subr.bf16.mxu0 0
        %1287 = vmatpush1.bf16.xpose.msra.mxu0 0
        %1288 = vmatprep.subr.bf16.mxu0 0
        %1289 = vmatpush1.bf16.xpose.msra.mxu0 0
        %1290 = vmatprep.subr.bf16.mxu0 0
        %1291 = vmatpush1.bf16.xpose.msra.mxu0 0
        %1292 = vmatprep.subr.bf16.mxu0 0
        %1293 = vmatpush1.bf16.xpose.msra.mxu0 0
        %1294 = vmatprep.subr.bf16.mxu0 0
        %1295 = vmatpush1.bf16.xpose.msra.mxu0 0
        %1296 = vmatprep.subr.bf16.mxu0 0
        %1297 = vmatpush1.bf16.xpose.msra.mxu0 0
        %1298 = vmatprep.subr.bf16.mxu0 0
        %1299 = vmatpush1.bf16.xpose.msra.mxu0 0
        %1300 = vmatprep.subr.bf16.mxu0 0
        %1301 = vmatpush1.bf16.xpose.msra.mxu0 0
        %1302 = vmatprep.subr.bf16.mxu0 0
        %1303 = vmatpush1.bf16.xpose.msra.mxu0 0
        %1304 = vmatprep.subr.bf16.mxu0 0
        %1305 = vmatpush1.bf16.xpose.msra.mxu0 0
        %1306 = vmatprep.mubr.bf16.mxu0 0
        %1307 = vmatmul.mubr.bf16.gmra.mrb[0].mxu0 %v1269
        %v1308 = vpop.f32.mrb[0].mxu0
        %v1309 = vadd.f32 0.0, %v1308
        %v1310 = vpop.f32.mrb[0].mxu0
        %v1311 = vpop.f32.mrb[0].mxu0
        %v1312 = vpop.f32.mrb[0].mxu0
        %1313 = vdwg.mxu0
        %1314 = vxpose.xlu0.b32.start [1/16] %v1171, 128
        %1315 = vxpose.xlu0.b32.cont [2/16] %v1217, 128
        %1316 = vxpose.xlu0.b32.cont [3/16] %v1263, 128
        %1317 = vxpose.xlu0.b32.cont [4/16] %v1309, 128
        %1318 = vxpose.xlu0.b32.cont [5/16] 0.0, 128
        %1319 = vxpose.xlu0.b32.cont [6/16] 0.0, 128
        %1320 = vxpose.xlu0.b32.cont [7/16] 0.0, 128
        %1321 = vxpose.xlu0.b32.cont [8/16] 0.0, 128
        %1322 = vxpose.xlu0.b32.cont [9/16] 0.0, 128
        %1323 = vxpose.xlu0.b32.cont [10/16] 0.0, 128
        %1324 = vxpose.xlu0.b32.cont [11/16] 0.0, 128
        %1325 = vxpose.xlu0.b32.cont [12/16] 0.0, 128
        %1326 = vxpose.xlu0.b32.cont [13/16] 0.0, 128
        %1327 = vxpose.xlu0.b32.cont [14/16] 0.0, 128
        %1328 = vxpose.xlu0.b32.cont [15/16] 0.0, 128
        %1329 = vxpose.xlu0.b32.end [16/16] 0.0, 128
        %v1330 = vpop.trf.xlu0
        %v1331 = vpop.trf.xlu0
        %v1332 = vpop.trf.xlu0
        %v1333 = vpop.trf.xlu0
        %v1334 = vpop.trf.xlu0
        %v1335 = vpop.trf.xlu0
        %v1336 = vpop.trf.xlu0
        %v1337 = vpop.trf.xlu0
        %v1338 = vpop.trf.xlu0
        %v1339 = vpop.trf.xlu0
        %v1340 = vpop.trf.xlu0
        %v1341 = vpop.trf.xlu0
        %v1342 = vpop.trf.xlu0
        %v1343 = vpop.trf.xlu0
        %v1344 = vpop.trf.xlu0
        %v1345 = vpop.trf.xlu0
        %v1346 = vpack.c.bf16 %v1330, %v1330
        %v1347 = vld [vmem:[%s5] sm:$0xf]
        %v1348 = vld [vmem:[%s5 + $0x4] sm:$0xf]
        %v1349 = vld [vmem:[%s5 + $0x8] sm:$0xf]
        %v1350 = vld [vmem:[%s5 + $0xc] sm:$0xf]
        %v1355 = vunpack.c.l.b16 %v1347
        %v1356 = vunpack.c.l.b16 %v1348
        %v1357 = vunpack.c.l.b16 %v1349
        %v1358 = vunpack.c.l.b16 %v1350
        %v1359 = vpack.c.b16 %v1356, %v1355
        %v1360 = vpack.c.b16 %v1358, %v1357
        %v1364 = vsel %vm495, %v1346, 0
        %1366 = vmatprep.subr.bf16.mxu0 0
        %1367 = vmatpush1.bf16.msra.mxu0 %v1359
        %1368 = vmatprep.subr.bf16.mxu0 0
        %1369 = vmatpush1.bf16.msra.mxu0 %v1360
        %1370 = vmatprep.subr.bf16.mxu0 0
        %1371 = vmatpush1.bf16.msra.mxu0 0
        %1372 = vmatprep.subr.bf16.mxu0 0
        %1373 = vmatpush1.bf16.msra.mxu0 0
        %1374 = vmatprep.subr.bf16.mxu0 0
        %1375 = vmatpush1.bf16.msra.mxu0 0
        %1376 = vmatprep.subr.bf16.mxu0 0
        %1377 = vmatpush1.bf16.msra.mxu0 0
        %1378 = vmatprep.subr.bf16.mxu0 0
        %1379 = vmatpush1.bf16.msra.mxu0 0
        %1380 = vmatprep.subr.bf16.mxu0 0
        %1381 = vmatpush1.bf16.msra.mxu0 0
        %1382 = vmatprep.subr.bf16.mxu0 0
        %1383 = vmatpush1.bf16.msra.mxu0 0
        %1384 = vmatprep.subr.bf16.mxu0 0
        %1385 = vmatpush1.bf16.msra.mxu0 0
        %1386 = vmatprep.subr.bf16.mxu0 0
        %1387 = vmatpush1.bf16.msra.mxu0 0
        %1388 = vmatprep.subr.bf16.mxu0 0
        %1389 = vmatpush1.bf16.msra.mxu0 0
        %1390 = vmatprep.subr.bf16.mxu0 0
        %1391 = vmatpush1.bf16.msra.mxu0 0
        %1392 = vmatprep.subr.bf16.mxu0 0
        %1393 = vmatpush1.bf16.msra.mxu0 0
        %1394 = vmatprep.subr.bf16.mxu0 0
        %1395 = vmatpush1.bf16.msra.mxu0 0
        %1396 = vmatprep.subr.bf16.mxu0 0
        %1397 = vmatpush1.bf16.msra.mxu0 0
        %1398 = vmatprep.mubr.bf16.mxu0 0
        %1399 = vmatmul.mubr.bf16.gmra.mrb[0].mxu0 %v1364
        %v1400 = vpop.f32.mrb[0].mxu0
        %v1401 = vadd.f32 0.0, %v1400
        %v1402 = vpop.f32.mrb[0].mxu0
        %v1403 = vpop.f32.mrb[0].mxu0
        %v1404 = vpop.f32.mrb[0].mxu0
        %1405 = vdwg.mxu0
        %v1406 = vadd.f32 %v492, %v1401
        %v1407 = vld [vmem:[%s6] sm:$0x1]
        %v1409 = vlaneseq
        %v1410 = vshrl.u32 %v1409, 7
        %v1411 = vsub.s32 0, %v1410
        %v1412 = vrot.slane %v1407, %v1411
        %v1414 = vadd.f32 %v1406, %v1412
        %v1415 = vld [vmem:[%s7] sm:$0x1]
        %v1416 = vld [vmem:[%s8] sm:$0x1]
        %v1417 = vsel %vm495, %v1414, 0.0
        %1418 = vadd.xlane.f32.xlu0 %v1417
        %v1419 = vpop.xlane.xlu0 %1418
        %v1420 = vmul.f32 %v1419, %v499
        %v1421 = vsub.f32 %v1414, %v1420
        %v1422 = vmul.f32 %v1421, %v1421
        %v1423 = vsel %vm495, %v1422, 0.0
        %1424 = vadd.xlane.f32.xlu0 %v1423
        %v1425 = vpop.xlane.xlu0 %1424
        %v1426 = vmul.f32 %v1425, %v499
        %v1427 = vadd.f32 %v1426, 1e-05
        %v1428 = vrsqrt.pop %v1427
        %v1429 = vmul.f32 %v1421, %v1428
        %v1431 = vlaneseq
        %v1432 = vshrl.u32 %v1431, 7
        %v1433 = vsub.s32 0, %v1432
        %v1434 = vrot.slane %v1415, %v1433
        %v1436 = vmul.f32 %v1429, %v1434
        %v1438 = vlaneseq
        %v1439 = vshrl.u32 %v1438, 7
        %v1440 = vsub.s32 0, %v1439
        %v1441 = vrot.slane %v1416, %v1440
        %v1443 = vadd.f32 %v1436, %v1441
        %v1444 = vpack.c.bf16 %v1443, %v1443
        %v1445 = vld [vmem:[%s9] sm:$0xf]
        %v1446 = vld [vmem:[%s9 + $0x4] sm:$0xf]
        %v1447 = vld [vmem:[%s9 + $0x8] sm:$0xf]
        %v1448 = vld [vmem:[%s9 + $0xc] sm:$0xf]
        %v1449 = vld [vmem:[%s10] sm:$0x1]
        %v1451 = vlaneseq
        %v1452 = vshrl.u32 %v1451, 7
        %v1453 = vsub.s32 0, %v1452
        %v1454 = vrot.slane %v1449, %v1453
        %v1460 = vunpack.c.l.b16 %v1445
        %v1461 = vunpack.c.l.b16 %v1446
        %v1462 = vunpack.c.l.b16 %v1447
        %v1463 = vunpack.c.l.b16 %v1448
        %v1464 = vpack.c.b16 %v1461, %v1460
        %v1465 = vpack.c.b16 %v1463, %v1462
        %v1469 = vsel %vm495, %v1444, 0
        %1471 = vmatprep.subr.bf16.mxu0 0
        %1472 = vmatpush1.bf16.msra.mxu0 %v1464
        %1473 = vmatprep.subr.bf16.mxu0 0
        %1474 = vmatpush1.bf16.msra.mxu0 %v1465
        %1475 = vmatprep.subr.bf16.mxu0 0
        %1476 = vmatpush1.bf16.msra.mxu0 0
        %1477 = vmatprep.subr.bf16.mxu0 0
        %1478 = vmatpush1.bf16.msra.mxu0 0
        %1479 = vmatprep.subr.bf16.mxu0 0
        %1480 = vmatpush1.bf16.msra.mxu0 0
        %1481 = vmatprep.subr.bf16.mxu0 0
        %1482 = vmatpush1.bf16.msra.mxu0 0
        %1483 = vmatprep.subr.bf16.mxu0 0
        %1484 = vmatpush1.bf16.msra.mxu0 0
        %1485 = vmatprep.subr.bf16.mxu0 0
        %1486 = vmatpush1.bf16.msra.mxu0 0
        %1487 = vmatprep.subr.bf16.mxu0 0
        %1488 = vmatpush1.bf16.msra.mxu0 0
        %1489 = vmatprep.subr.bf16.mxu0 0
        %1490 = vmatpush1.bf16.msra.mxu0 0
        %1491 = vmatprep.subr.bf16.mxu0 0
        %1492 = vmatpush1.bf16.msra.mxu0 0
        %1493 = vmatprep.subr.bf16.mxu0 0
        %1494 = vmatpush1.bf16.msra.mxu0 0
        %1495 = vmatprep.subr.bf16.mxu0 0
        %1496 = vmatpush1.bf16.msra.mxu0 0
        %1497 = vmatprep.subr.bf16.mxu0 0
        %1498 = vmatpush1.bf16.msra.mxu0 0
        %1499 = vmatprep.subr.bf16.mxu0 0
        %1500 = vmatpush1.bf16.msra.mxu0 0
        %1501 = vmatprep.subr.bf16.mxu0 0
        %1502 = vmatpush1.bf16.msra.mxu0 0
        %1503 = vmatprep.mubr.bf16.mxu0 0
        %1504 = vmatmul.mubr.bf16.gmra.mrb[0].mxu0 %v1469
        %v1505 = vpop.f32.mrb[0].mxu0
        %v1506 = vadd.f32 %v1454, %v1505
        %v1507 = vpop.f32.mrb[0].mxu0
        %v1508 = vpop.f32.mrb[0].mxu0
        %v1509 = vpop.f32.mrb[0].mxu0
        %1510 = vdwg.mxu0
        %v1511 = vmul.f32 %v1506, %v1506
        %v1512 = vmul.f32 %v1506, %v1511
        %v1513 = vmul.f32 %v1512, 0.044715
        %v1514 = vadd.f32 %v1506, %v1513
        %v1515 = vmul.f32 %v1514, 0.7978846
        %v1516 = vtanh.pop %v1515
        %v1517 = vadd.f32 %v1516, 1.0
        %v1518 = vmul.f32 %v1517, 0.5
        %v1519 = vmul.f32 %v1506, %v1518
        %v1520 = vpack.c.bf16 %v1519, %v1519
        %v1521 = vld [vmem:[%s11] sm:$0xf]
        %v1522 = vld [vmem:[%s11 + $0x4] sm:$0xf]
        %v1523 = vld [vmem:[%s11 + $0x8] sm:$0xf]
        %v1524 = vld [vmem:[%s11 + $0xc] sm:$0xf]
        %v1525 = vld [vmem:[%s11 + $0x10] sm:$0xf]
        %v1526 = vld [vmem:[%s11 + $0x14] sm:$0xf]
        %v1527 = vld [vmem:[%s11 + $0x18] sm:$0xf]
        %v1528 = vld [vmem:[%s11 + $0x1c] sm:$0xf]
        %v1529 = vld [vmem:[%s11 + $0x20] sm:$0xf]
        %v1530 = vld [vmem:[%s11 + $0x24] sm:$0xf]
        %v1531 = vld [vmem:[%s11 + $0x28] sm:$0xf]
        %v1532 = vld [vmem:[%s11 + $0x2c] sm:$0xf]
        %v1533 = vld [vmem:[%s11 + $0x30] sm:$0xf]
        %v1534 = vld [vmem:[%s11 + $0x34] sm:$0xf]
        %v1535 = vld [vmem:[%s11 + $0x38] sm:$0xf]
        %v1536 = vld [vmem:[%s11 + $0x3c] sm:$0xf]
        %v1553 = vunpack.c.l.b16 %v1521
        %v1554 = vunpack.c.l.b16 %v1522
        %v1555 = vunpack.c.l.b16 %v1523
        %v1556 = vunpack.c.l.b16 %v1524
        %v1557 = vunpack.c.l.b16 %v1525
        %v1558 = vunpack.c.l.b16 %v1526
        %v1559 = vunpack.c.l.b16 %v1527
        %v1560 = vunpack.c.l.b16 %v1528
        %v1561 = vunpack.c.l.b16 %v1529
        %v1562 = vunpack.c.l.b16 %v1530
        %v1563 = vunpack.c.l.b16 %v1531
        %v1564 = vunpack.c.l.b16 %v1532
        %v1565 = vunpack.c.l.b16 %v1533
        %v1566 = vunpack.c.l.b16 %v1534
        %v1567 = vunpack.c.l.b16 %v1535
        %v1568 = vunpack.c.l.b16 %v1536
        %v1569 = vpack.c.b16 %v1554, %v1553
        %v1570 = vpack.c.b16 %v1556, %v1555
        %v1571 = vpack.c.b16 %v1558, %v1557
        %v1572 = vpack.c.b16 %v1560, %v1559
        %v1573 = vpack.c.b16 %v1562, %v1561
        %v1574 = vpack.c.b16 %v1564, %v1563
        %v1575 = vpack.c.b16 %v1566, %v1565
        %v1576 = vpack.c.b16 %v1568, %v1567
        %1585 = vmatprep.subr.bf16.mxu0 0
        %1586 = vmatpush1.bf16.msra.mxu0 %v1569
        %1587 = vmatprep.subr.bf16.mxu0 0
        %1588 = vmatpush1.bf16.msra.mxu0 %v1570
        %1589 = vmatprep.subr.bf16.mxu0 0
        %1590 = vmatpush1.bf16.msra.mxu0 %v1571
        %1591 = vmatprep.subr.bf16.mxu0 0
        %1592 = vmatpush1.bf16.msra.mxu0 %v1572
        %1593 = vmatprep.subr.bf16.mxu0 0
        %1594 = vmatpush1.bf16.msra.mxu0 %v1573
        %1595 = vmatprep.subr.bf16.mxu0 0
        %1596 = vmatpush1.bf16.msra.mxu0 %v1574
        %1597 = vmatprep.subr.bf16.mxu0 0
        %1598 = vmatpush1.bf16.msra.mxu0 %v1575
        %1599 = vmatprep.subr.bf16.mxu0 0
        %1600 = vmatpush1.bf16.msra.mxu0 %v1576
        %1601 = vmatprep.subr.bf16.mxu0 0
        %1602 = vmatpush1.bf16.msra.mxu0 0
        %1603 = vmatprep.subr.bf16.mxu0 0
        %1604 = vmatpush1.bf16.msra.mxu0 0
        %1605 = vmatprep.subr.bf16.mxu0 0
        %1606 = vmatpush1.bf16.msra.mxu0 0
        %1607 = vmatprep.subr.bf16.mxu0 0
        %1608 = vmatpush1.bf16.msra.mxu0 0
        %1609 = vmatprep.subr.bf16.mxu0 0
        %1610 = vmatpush1.bf16.msra.mxu0 0
        %1611 = vmatprep.subr.bf16.mxu0 0
        %1612 = vmatpush1.bf16.msra.mxu0 0
        %1613 = vmatprep.subr.bf16.mxu0 0
        %1614 = vmatpush1.bf16.msra.mxu0 0
        %1615 = vmatprep.subr.bf16.mxu0 0
        %1616 = vmatpush1.bf16.msra.mxu0 0
        %1617 = vmatprep.mubr.bf16.mxu0 0
        %1618 = vmatmul.mubr.bf16.gmra.mrb[0].mxu0 %v1520
        %v1619 = vpop.f32.mrb[0].mxu0
        %v1620 = vadd.f32 0.0, %v1619
        %v1621 = vpop.f32.mrb[0].mxu0
        %v1622 = vpop.f32.mrb[0].mxu0
        %v1623 = vpop.f32.mrb[0].mxu0
        %1624 = vdwg.mxu0
        %v1625 = vadd.f32 %v1414, %v1620
        %v1626 = vld [vmem:[%s12] sm:$0x1]
        %v1628 = vlaneseq
        %v1629 = vshrl.u32 %v1628, 7
        %v1630 = vsub.s32 0, %v1629
        %v1631 = vrot.slane %v1626, %v1630
        %v1633 = vadd.f32 %v1625, %v1631
        %v1634 = vpack.c.bf16 %v1633, %v1633
        %vm1635 = vcmask 257024
        %1636 = vst.msk [vmem:[%s485] sm:$0xf] %vm1635, %v1634
        %s1637 = sand.u32 %s357, 1
        %s1638 = scalar_lea.sflag [#allocation3], %s1637
        %s1639 = sand.u32 %s357, 1
        %s1640 = smul.addr %s1639, 4
        %s1641 = scalar_lea.vmem [#allocation2], %s1640
        // Predicated region
        $region81: #{tpu_custom_call.1} parent=79 // pred_check
          %p1642 = pneg %p367
        $region82: #{tpu_custom_call.1} parent=79 // pred_check_branch
          %1644 = sbr.rel (%p1642) target = $region84
        $region83: #{tpu_custom_call.1} parent=79 // pred_region
          %s1646 = ssub.s32 64, 64
          %1647 = vsyncadd %s1638, %s1646
          %s1648 = smul.addr %s29, 64
          %s1649 = scalar_lea.hbm %s15, %s1648
          %s1651 = sshll.u32 %s1641, 4
          %s1652 = int_to_ptr.vmem [resolvable:$true] %s1651
          %1654 = dma.vmem_to_hbm [thread:$0]  %s1652, 64, %s1649, %s1638
        $region84: #{tpu_custom_call.1} parent=79 // pred_fallthru
          _
      $region80: #{tpu_custom_call.1} parent=5 // pred_fallthru
        _
      %p1655 = scmp.le.s32.totalorder 2, %s24
      // Predicated region
      $region85: #{tpu_custom_call.1} parent=5 // pred_check
        %p1656 = pneg %p1655
      $region86: #{tpu_custom_call.1} parent=5 // pred_check_branch
        %1658 = sbr.rel (%p1656) target = $region88
      $region87: #{tpu_custom_call.1} parent=5 // pred_region
        %s1659 = ssub.s32 %s24, 2
        // Predicated region
        $region89: #{tpu_custom_call.1} parent=87 // pred_check
          %p1660 = pneg %p373
        $region90: #{tpu_custom_call.1} parent=87 // pred_check_branch
          %1662 = sbr.rel (%p1660) target = $region92
        $region91: #{tpu_custom_call.1} parent=87 // pred_region
          %s1663 = sand.u32 %s358, 1
          %s1664 = scalar_lea.sflag [#allocation3], %s1663
          %s1665 = sand.u32 %s358, 1
          %s1666 = smul.addr %s1665, 4
          %s1667 = scalar_lea.vmem [#allocation2], %s1666
          %1668 = dma.done %s1664, 64
        $region92: #{tpu_custom_call.1} parent=87 // pred_fallthru
          _
      $region88: #{tpu_custom_call.1} parent=5 // pred_fallthru
        _
    $region6: #{tpu_custom_call.1} parent=1 // loop_footer
      %s28 = sadd.s32 1, %s24
    $region7: #{tpu_custom_call.1} parent=1 // loop_footer_branch
      %23 = sbr.rel target = $region3
    $region8: #{tpu_custom_call.1} parent=1 // loop_exit
      _
    %1669 = vsyncpa [#allocation3], 1
    %s1670 = scalar_lea.sflag [#allocation3], 1
    %1671 = vsyncpa %s1670, 1

</llo_original>
